<compile_context>
chip_gen: v7x
topology: tpu7x:2x2x1
jax: 0.10.0
libtpu: 0.0.40
codegen_flags: <defaults>
</compile_context>

<pallas_src>
import functools

import jax
import jax.numpy as jnp
from jax.experimental import pallas as pl
from jax.experimental.pallas import tpu as pltpu


def _round_up(v, m):
    return ((v + m - 1) // m) * m


# -----------------------------------------------------------------------------
# Fused Pallas kernel: all GCN layers + mean pooling for G graphs per grid step
# -----------------------------------------------------------------------------
def fused_gcn_kernel(a_ref, x_ref, r_ref, w_ref, b_ref, o_ref, *,
                     num_layers, graphs_per_step):
    # a_ref: [G, N_pad, N_pad]  bf16  normalized dense adjacency (zero-padded)
    # x_ref: [G, N_pad, D_pad]  bf16  node features (zero-padded)
    # r_ref: [G, 1, N_pad]      bf16  pooling row  r = (1/n) 1^T A   (lane-dense)
    # w_ref: [L, D_pad, D_pad]  bf16  stacked, zero-padded layer weights (resident)
    # b_ref: [L, 1, D_pad]      f32   stacked, zero-padded biases       (resident)
    # o_ref: [G, 1, D_pad]      f32   pooled graph embeddings
    for g in range(graphs_per_step):            # static unroll, G is small
        a = a_ref[g]                            # [N_pad, N_pad] bf16
        h = x_ref[g]                            # [N_pad, D_pad] bf16 (layer-0 operand)
        # Hidden layers: h <- relu(A (h W_l) + b_l)   (f32 accumulate, f32 elementwise)
        for layer in range(num_layers - 1):
            xw = jnp.dot(h.astype(jnp.bfloat16), w_ref[layer],
                         preferred_element_type=jnp.float32)
            agg = jnp.dot(a, xw.astype(jnp.bfloat16),
                          preferred_element_type=jnp.float32)
            h = jnp.maximum(agg + b_ref[layer], 0.0)
        # Last layer fused with mean pooling:
        #   pooled = (m^T A) (h W_L) + b_L     since sum(mask) == 1
        xw = jnp.dot(h.astype(jnp.bfloat16), w_ref[num_layers - 1],
                     preferred_element_type=jnp.float32)
        pooled = jnp.dot(r_ref[g], xw.astype(jnp.bfloat16),
                         preferred_element_type=jnp.float32)
        o_ref[g] = pooled + b_ref[num_layers - 1]


# -----------------------------------------------------------------------------
# Wrapper: batched, fused forward (one pallas_call for the whole batch)
# -----------------------------------------------------------------------------
def fused_gcn_forward(w_stack, b_stack, a_batch, x_batch, r_batch,
                      hidden_dim, graphs_per_step):
    padded_batch, n_pad, _ = a_batch.shape
    num_layers, d_pad, _ = w_stack.shape
    num_steps = padded_batch // graphs_per_step

    # Advisory cost estimate so XLA schedules surrounding ops sensibly.
    flops = padded_batch * (
        num_layers * 2 * n_pad * d_pad * d_pad            # X W per layer
        + (num_layers - 1) * 2 * n_pad * n_pad * d_pad    # A (X W), hidden layers
        + 2 * n_pad * d_pad)                              # fused pooling matvec
    bytes_accessed = (
        padded_batch * (n_pad * n_pad + n_pad * d_pad + n_pad) * 2  # A, X, r (bf16)
        + num_layers * d_pad * d_pad * 2                            # W (bf16)
        + num_layers * d_pad * 4                                    # b (f32)
        + padded_batch * d_pad * 4)                                 # out (f32)

    # VMEM budget: double-buffered per-step blocks + resident W/b (+ slack).
    step_block_bytes = graphs_per_step * (
        n_pad * n_pad * 2 + n_pad * d_pad * 2 + n_pad * 2 + d_pad * 4)
    resident_bytes = num_layers * (d_pad * d_pad * 2 + d_pad * 4)
    vmem_limit = int(min(max(2 * (step_block_bytes + resident_bytes) + (4 << 20),
                             16 << 20), 64 << 20))

    out = pl.pallas_call(
        functools.partial(fused_gcn_kernel,
                          num_layers=num_layers,
                          graphs_per_step=graphs_per_step),
        out_shape=jax.ShapeDtypeStruct((padded_batch, 1, d_pad), jnp.float32),
        grid=(num_steps,),
        in_specs=[
            pl.BlockSpec((graphs_per_step, n_pad, n_pad), lambda b: (b, 0, 0)),  # A
            pl.BlockSpec((graphs_per_step, n_pad, d_pad), lambda b: (b, 0, 0)),  # X
            pl.BlockSpec((graphs_per_step, 1, n_pad), lambda b: (b, 0, 0)),      # r
            pl.BlockSpec((num_layers, d_pad, d_pad), lambda b: (0, 0, 0)),       # W (resident)
            pl.BlockSpec((num_layers, 1, d_pad), lambda b: (0, 0, 0)),           # b (resident)
        ],
        out_specs=pl.BlockSpec((graphs_per_step, 1, d_pad), lambda b: (b, 0, 0)),
        compiler_params=pltpu.CompilerParams(
            dimension_semantics=("parallel",),     # shard graph blocks across TCs
            vmem_limit_bytes=vmem_limit),
        cost_estimate=pl.CostEstimate(flops=flops, transcendentals=0,
                                      bytes_accessed=bytes_accessed),
    )(a_batch, x_batch, r_batch, w_stack, b_stack)
    return out[:, 0, :hidden_dim]  # [padded_batch, hidden]


# -----------------------------------------------------------------------------
# Plain-JAX glue: adjacency normalization, padding, parameter init
# -----------------------------------------------------------------------------
def normalized_adjacency(edge_index, num_nodes):
    """GCN normalization: D^{-1/2} (A + I) D^{-1/2}, per-edge A[dst, src] += 1."""
    src, dst = edge_index[0], edge_index[1]
    a = jnp.zeros((num_nodes, num_nodes), jnp.float32).at[dst, src].add(1.0)
    a = a + jnp.eye(num_nodes, dtype=jnp.float32)
    deg = jnp.sum(a, axis=1)
    d_inv_sqrt = jnp.where(deg > 0, 1.0 / jnp.sqrt(deg), 0.0)
    return a * d_inv_sqrt[:, None] * d_inv_sqrt[None, :]


def _prepare_graph(x, edge_index, n_pad, d_pad):
    n, f = x.shape
    a = normalized_adjacency(edge_index, n)
    a_pad = jnp.zeros((n_pad, n_pad), jnp.float32).at[:n, :n].set(a)
    x_pad = jnp.zeros((n_pad, d_pad), jnp.float32).at[:n, :f].set(
        x.astype(jnp.float32))
    # Lane-dense pooling row folded with A:  r = (1/n) * 1_n^T A  ->  [1, n_pad]
    mask = jnp.zeros((1, n_pad), jnp.float32).at[0, :n].set(1.0 / n)
    r = mask @ a_pad
    return (a_pad.astype(jnp.bfloat16),
            x_pad.astype(jnp.bfloat16),
            r.astype(jnp.bfloat16))


def _pack_params(params, d_pad):
    layers = params["gcn"]
    num_layers = len(layers)
    w_stack = jnp.zeros((num_layers, d_pad, d_pad), jnp.float32)
    b_stack = jnp.zeros((num_layers, 1, d_pad), jnp.float32)
    for i, layer in enumerate(layers):
        w, b = layer["w"], layer["b"]
        w_stack = w_stack.at[i, : w.shape[0], : w.shape[1]].set(w)
        b_stack = b_stack.at[i, 0, : b.shape[-1]].set(b)
    return w_stack.astype(jnp.bfloat16), b_stack


def glorot(key, shape):
    fan_in, fan_out = shape
    limit = jnp.sqrt(6.0 / (fan_in + fan_out))
    return jax.random.uniform(key, shape, jnp.float32, -limit, limit)


def init_params(key, in_dim, hidden_dim, num_layers):
    keys = jax.random.split(key, num_layers)
    dims_in = [in_dim] + [hidden_dim] * (num_layers - 1)
    layers = []
    for i in range(num_layers):
        layers.append({
            "w": glorot(keys[i], (dims_in[i], hidden_dim)),
            "b": jnp.zeros((hidden_dim,), jnp.float32),
        })
    return {"gcn": layers}


# -----------------------------------------------------------------------------
# Model.forward equivalents
# -----------------------------------------------------------------------------
def batched_model_forward(params, graphs, graphs_per_step=None):
    """Run Model.forward on a list of (x, edge_index) graphs with ONE kernel call.

    Returns [B, hidden]; row b equals Model.forward(x_b, edge_index_b)."""
    in_dim = params["gcn"][0]["w"].shape[0]
    hidden_dim = params["gcn"][0]["w"].shape[1]
    d_pad = _round_up(max(in_dim, hidden_dim), 128)
    n_pad = max(_round_up(x.shape[0], 128) for x, _ in graphs)
    batch = len(graphs)
    if graphs_per_step is None:
        graphs_per_step = min(batch, 4)
    padded_batch = _round_up(batch, graphs_per_step)

    prepared = [_prepare_graph(x, e, n_pad, d_pad) for x, e in graphs]
    a_batch = jnp.stack([p[0] for p in prepared])
    x_batch = jnp.stack([p[1] for p in prepared])
    r_batch = jnp.stack([p[2] for p in prepared])
    if padded_batch > batch:
        pad = padded_batch - batch
        a_batch = jnp.pad(a_batch, ((0, pad), (0, 0), (0, 0)))
        x_batch = jnp.pad(x_batch, ((0, pad), (0, 0), (0, 0)))
        r_batch = jnp.pad(r_batch, ((0, pad), (0, 0), (0, 0)))

    w_stack, b_stack = _pack_params(params, d_pad)
    out = fused_gcn_forward(w_stack, b_stack, a_batch, x_batch, r_batch,
                            hidden_dim, graphs_per_step)
    return out[:batch]


def model_forward(params, x, edge_index):
    """Exact Model.forward: GCN stack -> mean over nodes -> [1, hidden]."""
    return batched_model_forward(params, [(x, edge_index)])


def reference_forward(params, x, edge_index):
    """Pure-JAX f32 reference for correctness checking."""
    a = normalized_adjacency(edge_index, x.shape[0])
    h = x.astype(jnp.float32)
    num_layers = len(params["gcn"])
    for i, layer in enumerate(params["gcn"]):
        h = a @ (h @ layer["w"]) + layer["b"]
        if i < num_layers - 1:
            h = jnp.maximum(h, 0.0)
    return jnp.mean(h, axis=0, keepdims=True)


# -----------------------------------------------------------------------------
# Demo
# -----------------------------------------------------------------------------
if __name__ == "__main__":
    IN_DIM = 8
    HIDDEN_DIM = 32
    NUM_LAYERS = 3
    N1, E1 = 10, 20
    N2, E2 = 12, 24

    key = jax.random.PRNGKey(0)
    k_param, k_x1, k_e1, k_x2, k_e2 = jax.random.split(key, 5)

    params = init_params(k_param, IN_DIM, HIDDEN_DIM, NUM_LAYERS)

    x1 = jax.random.normal(k_x1, (N1, IN_DIM), jnp.float32)
    e1 = jax.random.randint(k_e1, (2, E1), 0, N1)
    edge_index1 = jnp.concatenate([e1, e1[::-1]], axis=1)  # undirected

    x2 = jax.random.normal(k_x2, (N2, IN_DIM), jnp.float32)
    e2 = jax.random.randint(k_e2, (2, E2), 0, N2)
    edge_index2 = jnp.concatenate([e2, e2[::-1]], axis=1)  # undirected

    # Both graphs processed by a single fused, batched Pallas kernel.
    u = batched_model_forward(params, [(x1, edge_index1), (x2, edge_index2)])
    jax.block_until_ready(u)
    u1, u2 = u[0:1], u[1:2]
    assert u1.shape == (1, HIDDEN_DIM) and u2.shape == (1, HIDDEN_DIM)

    # Correctness vs. pure-JAX f32 reference (Model.forward semantics).
    # bf16 MXU operands (f32 accumulate) => loosen tolerance accordingly.
    ref1 = reference_forward(params, x1, edge_index1)
    ref2 = reference_forward(params, x2, edge_index2)
    assert jnp.allclose(u1, ref1, rtol=5e-2, atol=5e-2)
    assert jnp.allclose(u2, ref2, rtol=5e-2, atol=5e-2)

    print("KERNEL_OK")
</pallas_src>

<mosaic_0001>
module attributes {stable_mosaic.version = 11 : i64} {
  func.func @fused_gcn_kernel(%arg0: i32, %arg1: memref<2x128x128xbf16, #tpu.memory_space<vmem>>, %arg2: memref<2x128x128xbf16, #tpu.memory_space<vmem>>, %arg3: memref<2x1x128xbf16, #tpu.memory_space<vmem>>, %arg4: memref<3x128x128xbf16, #tpu.memory_space<vmem>>, %arg5: memref<3x1x128xf32, #tpu.memory_space<vmem>>, %arg6: memref<2x1x128xf32, #tpu.memory_space<vmem>>) attributes {dimension_semantics = [#tpu.dimension_semantics<parallel>], iteration_bounds = array<i64: 1>, scalar_prefetch = 0 : i64, scratch_operands = 0 : i64, tpu.core_type = #tpu.core_type<tc>, window_params = [{transform_indices = @transform_0, window_bounds = array<i64: 2, 128, 128>}, {transform_indices = @transform_1, window_bounds = array<i64: 2, 128, 128>}, {transform_indices = @transform_2, window_bounds = array<i64: 2, 1, 128>}, {pipeline_mode = #tpu.pipeline_mode<synchronous>, transform_indices = @transform_3, window_bounds = array<i64: 3, 128, 128>}, {pipeline_mode = #tpu.pipeline_mode<synchronous>, transform_indices = @transform_4, window_bounds = array<i64: 3, 1, 128>}, {transform_indices = @transform_5, window_bounds = array<i64: 2, 1, 128>}]} {
    %c0 = arith.constant 0 : index
    %c0_0 = arith.constant 0 : index
    %c0_1 = arith.constant 0 : index
    %0 = vector.load %arg1[%c0, %c0_0, %c0_1] : memref<2x128x128xbf16, #tpu.memory_space<vmem>>, vector<1x128x128xbf16>
    %1 = vector.shape_cast %0 : vector<1x128x128xbf16> to vector<128x128xbf16>
    %c0_2 = arith.constant 0 : index
    %c0_3 = arith.constant 0 : index
    %c0_4 = arith.constant 0 : index
    %2 = vector.load %arg2[%c0_2, %c0_3, %c0_4] : memref<2x128x128xbf16, #tpu.memory_space<vmem>>, vector<1x128x128xbf16>
    %3 = vector.shape_cast %2 : vector<1x128x128xbf16> to vector<128x128xbf16>
    %c0_5 = arith.constant 0 : index
    %c0_6 = arith.constant 0 : index
    %c0_7 = arith.constant 0 : index
    %4 = vector.load %arg4[%c0_5, %c0_6, %c0_7] : memref<3x128x128xbf16, #tpu.memory_space<vmem>>, vector<1x128x128xbf16>
    %5 = vector.shape_cast %4 : vector<1x128x128xbf16> to vector<128x128xbf16>
    %cst = arith.constant dense<0.000000e+00> : vector<128x128xf32>
    %6 = tpu.matmul %3, %5, %cst {dimension_numbers = #tpu.dot_dimension_numbers<[1], [0], [0], [1], [0, 0, 1, 1], [], []>} : vector<128x128xbf16>, vector<128x128xbf16>, vector<128x128xf32> -> vector<128x128xf32>
    %7 = arith.truncf %6 : vector<128x128xf32> to vector<128x128xbf16>
    %cst_8 = arith.constant dense<0.000000e+00> : vector<128x128xf32>
    %8 = tpu.matmul %1, %7, %cst_8 {dimension_numbers = #tpu.dot_dimension_numbers<[1], [0], [0], [1], [0, 0, 1, 1], [], []>} : vector<128x128xbf16>, vector<128x128xbf16>, vector<128x128xf32> -> vector<128x128xf32>
    %c0_9 = arith.constant 0 : index
    %c0_10 = arith.constant 0 : index
    %c0_11 = arith.constant 0 : index
    %9 = vector.load %arg5[%c0_9, %c0_10, %c0_11] : memref<3x1x128xf32, #tpu.memory_space<vmem>>, vector<1x1x128xf32>
    %10 = vector.shape_cast %9 : vector<1x1x128xf32> to vector<1x128xf32>
    %11 = vector.broadcast %10 : vector<1x128xf32> to vector<128x128xf32>
    %12 = arith.addf %8, %11 : vector<128x128xf32>
    %cst_12 = arith.constant 0.000000e+00 : f32
    %13 = vector.broadcast %cst_12 : f32 to vector<128x128xf32>
    %14 = arith.maximumf %12, %13 : vector<128x128xf32>
    %15 = arith.truncf %14 : vector<128x128xf32> to vector<128x128xbf16>
    %c1 = arith.constant 1 : index
    %c0_13 = arith.constant 0 : index
    %c0_14 = arith.constant 0 : index
    %16 = vector.load %arg4[%c1, %c0_13, %c0_14] : memref<3x128x128xbf16, #tpu.memory_space<vmem>>, vector<1x128x128xbf16>
    %17 = vector.shape_cast %16 : vector<1x128x128xbf16> to vector<128x128xbf16>
    %cst_15 = arith.constant dense<0.000000e+00> : vector<128x128xf32>
    %18 = tpu.matmul %15, %17, %cst_15 {dimension_numbers = #tpu.dot_dimension_numbers<[1], [0], [0], [1], [0, 0, 1, 1], [], []>} : vector<128x128xbf16>, vector<128x128xbf16>, vector<128x128xf32> -> vector<128x128xf32>
    %19 = arith.truncf %18 : vector<128x128xf32> to vector<128x128xbf16>
    %cst_16 = arith.constant dense<0.000000e+00> : vector<128x128xf32>
    %20 = tpu.matmul %1, %19, %cst_16 {dimension_numbers = #tpu.dot_dimension_numbers<[1], [0], [0], [1], [0, 0, 1, 1], [], []>} : vector<128x128xbf16>, vector<128x128xbf16>, vector<128x128xf32> -> vector<128x128xf32>
    %c1_17 = arith.constant 1 : index
    %c0_18 = arith.constant 0 : index
    %c0_19 = arith.constant 0 : index
    %21 = vector.load %arg5[%c1_17, %c0_18, %c0_19] : memref<3x1x128xf32, #tpu.memory_space<vmem>>, vector<1x1x128xf32>
    %22 = vector.shape_cast %21 : vector<1x1x128xf32> to vector<1x128xf32>
    %23 = vector.broadcast %22 : vector<1x128xf32> to vector<128x128xf32>
    %24 = arith.addf %20, %23 : vector<128x128xf32>
    %cst_20 = arith.constant 0.000000e+00 : f32
    %25 = vector.broadcast %cst_20 : f32 to vector<128x128xf32>
    %26 = arith.maximumf %24, %25 : vector<128x128xf32>
    %27 = arith.truncf %26 : vector<128x128xf32> to vector<128x128xbf16>
    %c2 = arith.constant 2 : index
    %c0_21 = arith.constant 0 : index
    %c0_22 = arith.constant 0 : index
    %28 = vector.load %arg4[%c2, %c0_21, %c0_22] : memref<3x128x128xbf16, #tpu.memory_space<vmem>>, vector<1x128x128xbf16>
    %29 = vector.shape_cast %28 : vector<1x128x128xbf16> to vector<128x128xbf16>
    %cst_23 = arith.constant dense<0.000000e+00> : vector<128x128xf32>
    %30 = tpu.matmul %27, %29, %cst_23 {dimension_numbers = #tpu.dot_dimension_numbers<[1], [0], [0], [1], [0, 0, 1, 1], [], []>} : vector<128x128xbf16>, vector<128x128xbf16>, vector<128x128xf32> -> vector<128x128xf32>
    %c0_24 = arith.constant 0 : index
    %c0_25 = arith.constant 0 : index
    %c0_26 = arith.constant 0 : index
    %31 = vector.load %arg3[%c0_24, %c0_25, %c0_26] : memref<2x1x128xbf16, #tpu.memory_space<vmem>>, vector<1x1x128xbf16>
    %32 = vector.shape_cast %31 : vector<1x1x128xbf16> to vector<1x128xbf16>
    %33 = arith.truncf %30 : vector<128x128xf32> to vector<128x128xbf16>
    %cst_27 = arith.constant dense<0.000000e+00> : vector<1x128xf32>
    %34 = tpu.matmul %32, %33, %cst_27 {dimension_numbers = #tpu.dot_dimension_numbers<[1], [0], [0], [1], [0, 0, 1, 1], [], []>} : vector<1x128xbf16>, vector<128x128xbf16>, vector<1x128xf32> -> vector<1x128xf32>
    %c2_28 = arith.constant 2 : index
    %c0_29 = arith.constant 0 : index
    %c0_30 = arith.constant 0 : index
    %35 = vector.load %arg5[%c2_28, %c0_29, %c0_30] : memref<3x1x128xf32, #tpu.memory_space<vmem>>, vector<1x1x128xf32>
    %36 = vector.shape_cast %35 : vector<1x1x128xf32> to vector<1x128xf32>
    %37 = arith.addf %34, %36 : vector<1x128xf32>
    %c0_31 = arith.constant 0 : index
    %c0_32 = arith.constant 0 : index
    %c0_33 = arith.constant 0 : index
    %38 = vector.load %arg6[%c0_31, %c0_32, %c0_33] : memref<2x1x128xf32, #tpu.memory_space<vmem>>, vector<1x1x128xf32>
    %39 = vector.shape_cast %38 : vector<1x1x128xf32> to vector<1x128xf32>
    %40 = vector.shape_cast %37 : vector<1x128xf32> to vector<1x1x128xf32>
    tpu.vector_store %arg6[%c0_31, %c0_32, %c0_33], %40 {strides = array<i32>} : memref<2x1x128xf32, #tpu.memory_space<vmem>>, vector<1x1x128xf32>,
    %c1_34 = arith.constant 1 : index
    %c0_35 = arith.constant 0 : index
    %c0_36 = arith.constant 0 : index
    %41 = vector.load %arg1[%c1_34, %c0_35, %c0_36] : memref<2x128x128xbf16, #tpu.memory_space<vmem>>, vector<1x128x128xbf16>
    %42 = vector.shape_cast %41 : vector<1x128x128xbf16> to vector<128x128xbf16>
    %c1_37 = arith.constant 1 : index
    %c0_38 = arith.constant 0 : index
    %c0_39 = arith.constant 0 : index
    %43 = vector.load %arg2[%c1_37, %c0_38, %c0_39] : memref<2x128x128xbf16, #tpu.memory_space<vmem>>, vector<1x128x128xbf16>
    %44 = vector.shape_cast %43 : vector<1x128x128xbf16> to vector<128x128xbf16>
    %c0_40 = arith.constant 0 : index
    %c0_41 = arith.constant 0 : index
    %c0_42 = arith.constant 0 : index
    %45 = vector.load %arg4[%c0_40, %c0_41, %c0_42] : memref<3x128x128xbf16, #tpu.memory_space<vmem>>, vector<1x128x128xbf16>
    %46 = vector.shape_cast %45 : vector<1x128x128xbf16> to vector<128x128xbf16>
    %cst_43 = arith.constant dense<0.000000e+00> : vector<128x128xf32>
    %47 = tpu.matmul %44, %46, %cst_43 {dimension_numbers = #tpu.dot_dimension_numbers<[1], [0], [0], [1], [0, 0, 1, 1], [], []>} : vector<128x128xbf16>, vector<128x128xbf16>, vector<128x128xf32> -> vector<128x128xf32>
    %48 = arith.truncf %47 : vector<128x128xf32> to vector<128x128xbf16>
    %cst_44 = arith.constant dense<0.000000e+00> : vector<128x128xf32>
    %49 = tpu.matmul %42, %48, %cst_44 {dimension_numbers = #tpu.dot_dimension_numbers<[1], [0], [0], [1], [0, 0, 1, 1], [], []>} : vector<128x128xbf16>, vector<128x128xbf16>, vector<128x128xf32> -> vector<128x128xf32>
    %c0_45 = arith.constant 0 : index
    %c0_46 = arith.constant 0 : index
    %c0_47 = arith.constant 0 : index
    %50 = vector.load %arg5[%c0_45, %c0_46, %c0_47] : memref<3x1x128xf32, #tpu.memory_space<vmem>>, vector<1x1x128xf32>
    %51 = vector.shape_cast %50 : vector<1x1x128xf32> to vector<1x128xf32>
    %52 = vector.broadcast %51 : vector<1x128xf32> to vector<128x128xf32>
    %53 = arith.addf %49, %52 : vector<128x128xf32>
    %cst_48 = arith.constant 0.000000e+00 : f32
    %54 = vector.broadcast %cst_48 : f32 to vector<128x128xf32>
    %55 = arith.maximumf %53, %54 : vector<128x128xf32>
    %56 = arith.truncf %55 : vector<128x128xf32> to vector<128x128xbf16>
    %c1_49 = arith.constant 1 : index
    %c0_50 = arith.constant 0 : index
    %c0_51 = arith.constant 0 : index
    %57 = vector.load %arg4[%c1_49, %c0_50, %c0_51] : memref<3x128x128xbf16, #tpu.memory_space<vmem>>, vector<1x128x128xbf16>
    %58 = vector.shape_cast %57 : vector<1x128x128xbf16> to vector<128x128xbf16>
    %cst_52 = arith.constant dense<0.000000e+00> : vector<128x128xf32>
    %59 = tpu.matmul %56, %58, %cst_52 {dimension_numbers = #tpu.dot_dimension_numbers<[1], [0], [0], [1], [0, 0, 1, 1], [], []>} : vector<128x128xbf16>, vector<128x128xbf16>, vector<128x128xf32> -> vector<128x128xf32>
    %60 = arith.truncf %59 : vector<128x128xf32> to vector<128x128xbf16>
    %cst_53 = arith.constant dense<0.000000e+00> : vector<128x128xf32>
    %61 = tpu.matmul %42, %60, %cst_53 {dimension_numbers = #tpu.dot_dimension_numbers<[1], [0], [0], [1], [0, 0, 1, 1], [], []>} : vector<128x128xbf16>, vector<128x128xbf16>, vector<128x128xf32> -> vector<128x128xf32>
    %c1_54 = arith.constant 1 : index
    %c0_55 = arith.constant 0 : index
    %c0_56 = arith.constant 0 : index
    %62 = vector.load %arg5[%c1_54, %c0_55, %c0_56] : memref<3x1x128xf32, #tpu.memory_space<vmem>>, vector<1x1x128xf32>
    %63 = vector.shape_cast %62 : vector<1x1x128xf32> to vector<1x128xf32>
    %64 = vector.broadcast %63 : vector<1x128xf32> to vector<128x128xf32>
    %65 = arith.addf %61, %64 : vector<128x128xf32>
    %cst_57 = arith.constant 0.000000e+00 : f32
    %66 = vector.broadcast %cst_57 : f32 to vector<128x128xf32>
    %67 = arith.maximumf %65, %66 : vector<128x128xf32>
    %68 = arith.truncf %67 : vector<128x128xf32> to vector<128x128xbf16>
    %c2_58 = arith.constant 2 : index
    %c0_59 = arith.constant 0 : index
    %c0_60 = arith.constant 0 : index
    %69 = vector.load %arg4[%c2_58, %c0_59, %c0_60] : memref<3x128x128xbf16, #tpu.memory_space<vmem>>, vector<1x128x128xbf16>
    %70 = vector.shape_cast %69 : vector<1x128x128xbf16> to vector<128x128xbf16>
    %cst_61 = arith.constant dense<0.000000e+00> : vector<128x128xf32>
    %71 = tpu.matmul %68, %70, %cst_61 {dimension_numbers = #tpu.dot_dimension_numbers<[1], [0], [0], [1], [0, 0, 1, 1], [], []>} : vector<128x128xbf16>, vector<128x128xbf16>, vector<128x128xf32> -> vector<128x128xf32>
    %c1_62 = arith.constant 1 : index
    %c0_63 = arith.constant 0 : index
    %c0_64 = arith.constant 0 : index
    %72 = vector.load %arg3[%c1_62, %c0_63, %c0_64] : memref<2x1x128xbf16, #tpu.memory_space<vmem>>, vector<1x1x128xbf16>
    %73 = vector.shape_cast %72 : vector<1x1x128xbf16> to vector<1x128xbf16>
    %74 = arith.truncf %71 : vector<128x128xf32> to vector<128x128xbf16>
    %cst_65 = arith.constant dense<0.000000e+00> : vector<1x128xf32>
    %75 = tpu.matmul %73, %74, %cst_65 {dimension_numbers = #tpu.dot_dimension_numbers<[1], [0], [0], [1], [0, 0, 1, 1], [], []>} : vector<1x128xbf16>, vector<128x128xbf16>, vector<1x128xf32> -> vector<1x128xf32>
    %c2_66 = arith.constant 2 : index
    %c0_67 = arith.constant 0 : index
    %c0_68 = arith.constant 0 : index
    %76 = vector.load %arg5[%c2_66, %c0_67, %c0_68] : memref<3x1x128xf32, #tpu.memory_space<vmem>>, vector<1x1x128xf32>
    %77 = vector.shape_cast %76 : vector<1x1x128xf32> to vector<1x128xf32>
    %78 = arith.addf %75, %77 : vector<1x128xf32>
    %c1_69 = arith.constant 1 : index
    %c0_70 = arith.constant 0 : index
    %c0_71 = arith.constant 0 : index
    %79 = vector.load %arg6[%c1_69, %c0_70, %c0_71] : memref<2x1x128xf32, #tpu.memory_space<vmem>>, vector<1x1x128xf32>
    %80 = vector.shape_cast %79 : vector<1x1x128xf32> to vector<1x128xf32>
    %81 = vector.shape_cast %78 : vector<1x128xf32> to vector<1x1x128xf32>
    tpu.vector_store %arg6[%c1_69, %c0_70, %c0_71], %81 {strides = array<i32>} : memref<2x1x128xf32, #tpu.memory_space<vmem>>, vector<1x1x128xf32>,
    return
  }
  func.func @transform_0(%arg0: i32) -> (i32, i32, i32) {
    %c0_i32 = arith.constant 0 : i32
    %c0_i32_0 = arith.constant 0 : i32
    %c0_i32_1 = arith.constant 0 : i32
    return %arg0, %c0_i32, %c0_i32_0 : i32, i32, i32
  }
  func.func @transform_1(%arg0: i32) -> (i32, i32, i32) {
    %c0_i32 = arith.constant 0 : i32
    %c0_i32_0 = arith.constant 0 : i32
    %c0_i32_1 = arith.constant 0 : i32
    return %arg0, %c0_i32, %c0_i32_0 : i32, i32, i32
  }
  func.func @transform_2(%arg0: i32) -> (i32, i32, i32) {
    %c0_i32 = arith.constant 0 : i32
    %c0_i32_0 = arith.constant 0 : i32
    %c0_i32_1 = arith.constant 0 : i32
    return %arg0, %c0_i32, %c0_i32_0 : i32, i32, i32
  }
  func.func @transform_3(%arg0: i32) -> (i32, i32, i32) {
    %c0_i32 = arith.constant 0 : i32
    %c0_i32_0 = arith.constant 0 : i32
    %c0_i32_1 = arith.constant 0 : i32
    %c0_i32_2 = arith.constant 0 : i32
    return %c0_i32, %c0_i32_0, %c0_i32_1 : i32, i32, i32
  }
  func.func @transform_4(%arg0: i32) -> (i32, i32, i32) {
    %c0_i32 = arith.constant 0 : i32
    %c0_i32_0 = arith.constant 0 : i32
    %c0_i32_1 = arith.constant 0 : i32
    %c0_i32_2 = arith.constant 0 : i32
    return %c0_i32, %c0_i32_0, %c0_i32_1 : i32, i32, i32
  }
  func.func @transform_5(%arg0: i32) -> (i32, i32, i32) {
    %c0_i32 = arith.constant 0 : i32
    %c0_i32_0 = arith.constant 0 : i32
    %c0_i32_1 = arith.constant 0 : i32
    return %arg0, %c0_i32, %c0_i32_0 : i32, i32, i32
  }
}

</mosaic_0001>

<llo_original>
// kernel: tpu_custom_call.1
$region0: #{tpu_custom_call.1}
  #allocation0 [shape = 'u32[]', space=smem, size = 0x4, offset = 0x4, fixed_abs, tag = 'smem constant byte address 0x4 - core index']
  #allocation1 [shape = 'u32[144,128]{1,0:T(1,128)}', space=vmem, size = 0x12000, scoped, tag = 'internal scratch']
  %s0 = inlined_call_operand.hbm [shape: bf16[2,128,128], index: 0, kind: input, shape index: {}]
  %s1 = inlined_call_operand.hbm [shape: bf16[2,128,128], index: 1, kind: input, shape index: {}]
  %s2 = inlined_call_operand.vmem [shape: bf16[2,1,128], index: 2, kind: input, shape index: {}]
  %s3 = inlined_call_operand.hbm [shape: bf16[3,128,128], index: 3, kind: input, shape index: {}]
  %s4 = inlined_call_operand.vmem [shape: f32[3,1,128], index: 4, kind: input, shape index: {}]
  %s5 = inlined_call_operand.hbm [shape: f32[2,1,128], index: 5, kind: output, shape index: {}]
  %s6 = sld [smem:[#allocation0]]
  $region42: #{tpu_custom_call.1} parent=0
    _
  %s8 = ssub.s32 1, %s6
  %s9 = scalar_select 0, %s8, %s6
  $region1: #{tpu_custom_call.1} parent=0
    #allocation2 [shape = 'u8[65536]{0}', space=vmem, size = 0x10000, scoped, tag = 'input window, operand 0, single buffered']
    #allocation3 [shape = 's32[1]{0}', space=sflag, size = 0x4, scoped, tag = 'scoped memory for tpu_custom_call.1']
    #allocation4 [shape = 's32[1]{0}', space=sflag, size = 0x4, scoped, tag = 'scoped memory for tpu_custom_call.1']
    #allocation5 [shape = 'u8[65536]{0}', space=vmem, size = 0x10000, scoped, tag = 'input window, operand 1, single buffered']
    #allocation6 [shape = 's32[1]{0}', space=sflag, size = 0x4, scoped, tag = 'scoped memory for tpu_custom_call.1']
    #allocation7 [shape = 'u8[98304]{0}', space=vmem, size = 0x18000, scoped, tag = 'input window, operand 3, single buffered']
    #allocation8 [shape = 'u8[1024]{0}', space=vmem, size = 0x400, scoped, tag = 'output window, operand 0, single buffered']
    %10 = vsyncpa [#allocation3], 0
    %11 = vsyncpa [#allocation6], 0
    %12 = vsyncpa [#allocation4], 0
    // Predicated region
    $region2: #{tpu_custom_call.1} parent=1 // pred_check
      _
    $region3: #{tpu_custom_call.1} parent=1 // pred_check_branch
      %14 = sbr.rel (0) target = $region5
    $region4: #{tpu_custom_call.1} parent=1 // pred_region
      %s16 = ssub.s32 2048, 2048
      %17 = vsyncadd [#allocation3], %s16
      %s18 = sshll.u32 [#allocation2], 4
      %s19 = int_to_ptr.vmem [resolvable:$true] %s18
      %24 = dma.hbm_to_vmem [thread:$0]  %s0, 2048, %s19, [#allocation3], 64, 64, 4
    $region5: #{tpu_custom_call.1} parent=1 // pred_fallthru
      _
    // Predicated region
    $region6: #{tpu_custom_call.1} parent=1 // pred_check
      _
    $region7: #{tpu_custom_call.1} parent=1 // pred_check_branch
      %26 = sbr.rel (0) target = $region9
    $region8: #{tpu_custom_call.1} parent=1 // pred_region
      %s28 = ssub.s32 2048, 2048
      %29 = vsyncadd [#allocation6], %s28
      %s30 = sshll.u32 [#allocation5], 4
      %s31 = int_to_ptr.vmem [resolvable:$true] %s30
      %36 = dma.hbm_to_vmem [thread:$0]  %s1, 2048, %s31, [#allocation6], 64, 64, 4
    $region9: #{tpu_custom_call.1} parent=1 // pred_fallthru
      _
    // Predicated region
    $region10: #{tpu_custom_call.1} parent=1 // pred_check
      _
    $region11: #{tpu_custom_call.1} parent=1 // pred_check_branch
      %38 = sbr.rel (0) target = $region13
    $region12: #{tpu_custom_call.1} parent=1 // pred_region
      _
    $region13: #{tpu_custom_call.1} parent=1 // pred_fallthru
      _
    // Predicated region
    $region14: #{tpu_custom_call.1} parent=1 // pred_check
      _
    $region15: #{tpu_custom_call.1} parent=1 // pred_check_branch
      %40 = sbr.rel (0) target = $region17
    $region16: #{tpu_custom_call.1} parent=1 // pred_region
      %s42 = ssub.s32 3072, 3072
      %43 = vsyncadd [#allocation6], %s42
      %s44 = sshll.u32 [#allocation7], 4
      %s45 = int_to_ptr.vmem [resolvable:$true] %s44
      %50 = dma.hbm_to_vmem [thread:$0]  %s3, 3072, %s45, [#allocation6], 64, 64, 4
    $region17: #{tpu_custom_call.1} parent=1 // pred_fallthru
      _
    // Predicated region
    $region18: #{tpu_custom_call.1} parent=1 // pred_check
      _
    $region19: #{tpu_custom_call.1} parent=1 // pred_check_branch
      %52 = sbr.rel (0) target = $region21
    $region20: #{tpu_custom_call.1} parent=1 // pred_region
      _
    $region21: #{tpu_custom_call.1} parent=1 // pred_fallthru
      _
    // Predicated region
    $region22: #{tpu_custom_call.1} parent=1 // pred_check
      _
    $region23: #{tpu_custom_call.1} parent=1 // pred_check_branch
      %54 = sbr.rel (0) target = $region25
    $region24: #{tpu_custom_call.1} parent=1 // pred_region
      %55 = dma.done [#allocation3], 2048
    $region25: #{tpu_custom_call.1} parent=1 // pred_fallthru
      _
    // Predicated region
    $region26: #{tpu_custom_call.1} parent=1 // pred_check
      _
    $region27: #{tpu_custom_call.1} parent=1 // pred_check_branch
      %57 = sbr.rel (0) target = $region29
    $region28: #{tpu_custom_call.1} parent=1 // pred_region
      %58 = dma.done [#allocation6], 2048
    $region29: #{tpu_custom_call.1} parent=1 // pred_fallthru
      _
    // Predicated region
    $region30: #{tpu_custom_call.1} parent=1 // pred_check
      _
    $region31: #{tpu_custom_call.1} parent=1 // pred_check_branch
      %60 = sbr.rel (0) target = $region33
    $region32: #{tpu_custom_call.1} parent=1 // pred_region
      %61 = dma.done [#allocation6], 3072
    $region33: #{tpu_custom_call.1} parent=1 // pred_fallthru
      _
    %v63 = vld [vmem:[#allocation2] sm:$0xf]
    %v64 = vld [vmem:[#allocation2 + $0x4] sm:$0xf]
    %v65 = vld [vmem:[#allocation2 + $0x8] sm:$0xf]
    %v66 = vld [vmem:[#allocation2 + $0xc] sm:$0xf]
    %v67 = vld [vmem:[#allocation2 + $0x10] sm:$0xf]
    %v68 = vld [vmem:[#allocation2 + $0x14] sm:$0xf]
    %v69 = vld [vmem:[#allocation2 + $0x18] sm:$0xf]
    %v70 = vld [vmem:[#allocation2 + $0x1c] sm:$0xf]
    %v71 = vld [vmem:[#allocation2 + $0x20] sm:$0xf]
    %v72 = vld [vmem:[#allocation2 + $0x24] sm:$0xf]
    %v73 = vld [vmem:[#allocation2 + $0x28] sm:$0xf]
    %v74 = vld [vmem:[#allocation2 + $0x2c] sm:$0xf]
    %v75 = vld [vmem:[#allocation2 + $0x30] sm:$0xf]
    %v76 = vld [vmem:[#allocation2 + $0x34] sm:$0xf]
    %v77 = vld [vmem:[#allocation2 + $0x38] sm:$0xf]
    %v78 = vld [vmem:[#allocation2 + $0x3c] sm:$0xf]
    %v79 = vld [vmem:[#allocation5] sm:$0xf]
    %v80 = vld [vmem:[#allocation5 + $0x4] sm:$0xf]
    %v81 = vld [vmem:[#allocation5 + $0x8] sm:$0xf]
    %v82 = vld [vmem:[#allocation5 + $0xc] sm:$0xf]
    %v83 = vld [vmem:[#allocation5 + $0x10] sm:$0xf]
    %v84 = vld [vmem:[#allocation5 + $0x14] sm:$0xf]
    %v85 = vld [vmem:[#allocation5 + $0x18] sm:$0xf]
    %v86 = vld [vmem:[#allocation5 + $0x1c] sm:$0xf]
    %v87 = vld [vmem:[#allocation5 + $0x20] sm:$0xf]
    %v88 = vld [vmem:[#allocation5 + $0x24] sm:$0xf]
    %v89 = vld [vmem:[#allocation5 + $0x28] sm:$0xf]
    %v90 = vld [vmem:[#allocation5 + $0x2c] sm:$0xf]
    %v91 = vld [vmem:[#allocation5 + $0x30] sm:$0xf]
    %v92 = vld [vmem:[#allocation5 + $0x34] sm:$0xf]
    %v93 = vld [vmem:[#allocation5 + $0x38] sm:$0xf]
    %v94 = vld [vmem:[#allocation5 + $0x3c] sm:$0xf]
    %v95 = vld [vmem:[#allocation7] sm:$0xf]
    %v96 = vld [vmem:[#allocation7 + $0x4] sm:$0xf]
    %v97 = vld [vmem:[#allocation7 + $0x8] sm:$0xf]
    %v98 = vld [vmem:[#allocation7 + $0xc] sm:$0xf]
    %v99 = vld [vmem:[#allocation7 + $0x10] sm:$0xf]
    %v100 = vld [vmem:[#allocation7 + $0x14] sm:$0xf]
    %v101 = vld [vmem:[#allocation7 + $0x18] sm:$0xf]
    %v102 = vld [vmem:[#allocation7 + $0x1c] sm:$0xf]
    %v103 = vld [vmem:[#allocation7 + $0x20] sm:$0xf]
    %v104 = vld [vmem:[#allocation7 + $0x24] sm:$0xf]
    %v105 = vld [vmem:[#allocation7 + $0x28] sm:$0xf]
    %v106 = vld [vmem:[#allocation7 + $0x2c] sm:$0xf]
    %v107 = vld [vmem:[#allocation7 + $0x30] sm:$0xf]
    %v108 = vld [vmem:[#allocation7 + $0x34] sm:$0xf]
    %v109 = vld [vmem:[#allocation7 + $0x38] sm:$0xf]
    %v110 = vld [vmem:[#allocation7 + $0x3c] sm:$0xf]
    %v127 = vunpack.c.l.b16 %v79
    %v128 = vunpack.c.l.b16 %v80
    %v129 = vunpack.c.l.b16 %v81
    %v130 = vunpack.c.l.b16 %v82
    %v131 = vunpack.c.l.b16 %v83
    %v132 = vunpack.c.l.b16 %v84
    %v133 = vunpack.c.l.b16 %v85
    %v134 = vunpack.c.l.b16 %v86
    %v135 = vunpack.c.l.b16 %v87
    %v136 = vunpack.c.l.b16 %v88
    %v137 = vunpack.c.l.b16 %v89
    %v138 = vunpack.c.l.b16 %v90
    %v139 = vunpack.c.l.b16 %v91
    %v140 = vunpack.c.l.b16 %v92
    %v141 = vunpack.c.l.b16 %v93
    %v142 = vunpack.c.l.b16 %v94
    %v143 = vpack.c.b16 %v128, %v127
    %v144 = vpack.c.b16 %v130, %v129
    %v145 = vpack.c.b16 %v132, %v131
    %v146 = vpack.c.b16 %v134, %v133
    %v147 = vpack.c.b16 %v136, %v135
    %v148 = vpack.c.b16 %v138, %v137
    %v149 = vpack.c.b16 %v140, %v139
    %v150 = vpack.c.b16 %v142, %v141
    %v175 = vunpack.c.l.b16 %v95
    %v176 = vunpack.c.l.b16 %v96
    %v177 = vunpack.c.l.b16 %v97
    %v178 = vunpack.c.l.b16 %v98
    %v179 = vunpack.c.l.b16 %v99
    %v180 = vunpack.c.l.b16 %v100
    %v181 = vunpack.c.l.b16 %v101
    %v182 = vunpack.c.l.b16 %v102
    %v183 = vunpack.c.l.b16 %v103
    %v184 = vunpack.c.l.b16 %v104
    %v185 = vunpack.c.l.b16 %v105
    %v186 = vunpack.c.l.b16 %v106
    %v187 = vunpack.c.l.b16 %v107
    %v188 = vunpack.c.l.b16 %v108
    %v189 = vunpack.c.l.b16 %v109
    %v190 = vunpack.c.l.b16 %v110
    %v191 = vpack.c.b16 %v176, %v175
    %v192 = vpack.c.b16 %v178, %v177
    %v193 = vpack.c.b16 %v180, %v179
    %v194 = vpack.c.b16 %v182, %v181
    %v195 = vpack.c.b16 %v184, %v183
    %v196 = vpack.c.b16 %v186, %v185
    %v197 = vpack.c.b16 %v188, %v187
    %v198 = vpack.c.b16 %v190, %v189
    %207 = vmatprep.subr.bf16.mxu0 0
    %208 = vmatpush1.bf16.msra.mxu0 %v191
    %209 = vmatprep.subr.bf16.mxu0 0
    %210 = vmatpush1.bf16.msra.mxu0 %v192
    %211 = vmatprep.subr.bf16.mxu0 0
    %212 = vmatpush1.bf16.msra.mxu0 %v193
    %213 = vmatprep.subr.bf16.mxu0 0
    %214 = vmatpush1.bf16.msra.mxu0 %v194
    %215 = vmatprep.subr.bf16.mxu0 0
    %216 = vmatpush1.bf16.msra.mxu0 %v195
    %217 = vmatprep.subr.bf16.mxu0 0
    %218 = vmatpush1.bf16.msra.mxu0 %v196
    %219 = vmatprep.subr.bf16.mxu0 0
    %220 = vmatpush1.bf16.msra.mxu0 %v197
    %221 = vmatprep.subr.bf16.mxu0 0
    %222 = vmatpush1.bf16.msra.mxu0 %v198
    %223 = vmatprep.subr.bf16.mxu0 0
    %224 = vmatpush1.bf16.msra.mxu0 0
    %225 = vmatprep.subr.bf16.mxu0 0
    %226 = vmatpush1.bf16.msra.mxu0 0
    %227 = vmatprep.subr.bf16.mxu0 0
    %228 = vmatpush1.bf16.msra.mxu0 0
    %229 = vmatprep.subr.bf16.mxu0 0
    %230 = vmatpush1.bf16.msra.mxu0 0
    %231 = vmatprep.subr.bf16.mxu0 0
    %232 = vmatpush1.bf16.msra.mxu0 0
    %233 = vmatprep.subr.bf16.mxu0 0
    %234 = vmatpush1.bf16.msra.mxu0 0
    %235 = vmatprep.subr.bf16.mxu0 0
    %236 = vmatpush1.bf16.msra.mxu0 0
    %237 = vmatprep.subr.bf16.mxu0 0
    %238 = vmatpush1.bf16.msra.mxu0 0
    %239 = vmatprep.mubr.bf16.mxu0 0
    %240 = vmatmul.mubr.bf16.gmra.mrb[0].mxu0 %v143
    %v241 = vpop.f32.mrb[0].mxu0
    %v242 = vadd.f32 0.0, %v241
    %v243 = vpop.f32.mrb[0].mxu0
    %v244 = vpop.f32.mrb[0].mxu0
    %v245 = vadd.f32 0.0, %v244
    %v246 = vpop.f32.mrb[0].mxu0
    %247 = vmatprep.mubr.bf16.mxu0 0
    %248 = vmatmul.mubr.bf16.gmra.mrb[0].mxu0 %v144
    %v249 = vpop.f32.mrb[0].mxu0
    %v250 = vadd.f32 0.0, %v249
    %v251 = vpop.f32.mrb[0].mxu0
    %v252 = vpop.f32.mrb[0].mxu0
    %v253 = vadd.f32 0.0, %v252
    %v254 = vpop.f32.mrb[0].mxu0
    %255 = vmatprep.mubr.bf16.mxu0 0
    %256 = vmatmul.mubr.bf16.gmra.mrb[0].mxu0 %v145
    %v257 = vpop.f32.mrb[0].mxu0
    %v258 = vadd.f32 0.0, %v257
    %v259 = vpop.f32.mrb[0].mxu0
    %v260 = vpop.f32.mrb[0].mxu0
    %v261 = vadd.f32 0.0, %v260
    %v262 = vpop.f32.mrb[0].mxu0
    %263 = vmatprep.mubr.bf16.mxu0 0
    %264 = vmatmul.mubr.bf16.gmra.mrb[0].mxu0 %v146
    %v265 = vpop.f32.mrb[0].mxu0
    %v266 = vadd.f32 0.0, %v265
    %v267 = vpop.f32.mrb[0].mxu0
    %v268 = vpop.f32.mrb[0].mxu0
    %v269 = vadd.f32 0.0, %v268
    %v270 = vpop.f32.mrb[0].mxu0
    %271 = vmatprep.mubr.bf16.mxu0 0
    %272 = vmatmul.mubr.bf16.gmra.mrb[0].mxu0 %v147
    %v273 = vpop.f32.mrb[0].mxu0
    %v274 = vadd.f32 0.0, %v273
    %v275 = vpop.f32.mrb[0].mxu0
    %v276 = vpop.f32.mrb[0].mxu0
    %v277 = vadd.f32 0.0, %v276
    %v278 = vpop.f32.mrb[0].mxu0
    %279 = vmatprep.mubr.bf16.mxu0 0
    %280 = vmatmul.mubr.bf16.gmra.mrb[0].mxu0 %v148
    %v281 = vpop.f32.mrb[0].mxu0
    %v282 = vadd.f32 0.0, %v281
    %v283 = vpop.f32.mrb[0].mxu0
    %v284 = vpop.f32.mrb[0].mxu0
    %v285 = vadd.f32 0.0, %v284
    %v286 = vpop.f32.mrb[0].mxu0
    %287 = vmatprep.mubr.bf16.mxu0 0
    %288 = vmatmul.mubr.bf16.gmra.mrb[0].mxu0 %v149
    %v289 = vpop.f32.mrb[0].mxu0
    %v290 = vadd.f32 0.0, %v289
    %v291 = vpop.f32.mrb[0].mxu0
    %v292 = vpop.f32.mrb[0].mxu0
    %v293 = vadd.f32 0.0, %v292
    %v294 = vpop.f32.mrb[0].mxu0
    %295 = vmatprep.mubr.bf16.mxu0 0
    %296 = vmatmul.mubr.bf16.gmra.mrb[0].mxu0 %v150
    %v297 = vpop.f32.mrb[0].mxu0
    %v298 = vadd.f32 0.0, %v297
    %v299 = vpop.f32.mrb[0].mxu0
    %v300 = vpop.f32.mrb[0].mxu0
    %v301 = vadd.f32 0.0, %v300
    %v302 = vpop.f32.mrb[0].mxu0
    %303 = vdwg.mxu0
    %v304 = vpack.c.bf16 %v245, %v242
    %v305 = vpack.c.bf16 %v253, %v250
    %v306 = vpack.c.bf16 %v261, %v258
    %v307 = vpack.c.bf16 %v269, %v266
    %v308 = vpack.c.bf16 %v277, %v274
    %v309 = vpack.c.bf16 %v285, %v282
    %v310 = vpack.c.bf16 %v293, %v290
    %v311 = vpack.c.bf16 %v301, %v298
    %v312 = vld [vmem:[%s4] sm:$0x1]
    %v314 = vlaneseq
    %v315 = vshrl.u32 %v314, 7
    %v316 = vsub.s32 0, %v315
    %v317 = vrot.slane %v312, %v316
    %v335 = vunpack.c.l.b16 %v63
    %v336 = vunpack.c.l.b16 %v64
    %v337 = vunpack.c.l.b16 %v65
    %v338 = vunpack.c.l.b16 %v66
    %v339 = vunpack.c.l.b16 %v67
    %v340 = vunpack.c.l.b16 %v68
    %v341 = vunpack.c.l.b16 %v69
    %v342 = vunpack.c.l.b16 %v70
    %v343 = vunpack.c.l.b16 %v71
    %v344 = vunpack.c.l.b16 %v72
    %v345 = vunpack.c.l.b16 %v73
    %v346 = vunpack.c.l.b16 %v74
    %v347 = vunpack.c.l.b16 %v75
    %v348 = vunpack.c.l.b16 %v76
    %v349 = vunpack.c.l.b16 %v77
    %v350 = vunpack.c.l.b16 %v78
    %v351 = vpack.c.b16 %v336, %v335
    %v352 = vpack.c.b16 %v338, %v337
    %v353 = vpack.c.b16 %v340, %v339
    %v354 = vpack.c.b16 %v342, %v341
    %v355 = vpack.c.b16 %v344, %v343
    %v356 = vpack.c.b16 %v346, %v345
    %v357 = vpack.c.b16 %v348, %v347
    %v358 = vpack.c.b16 %v350, %v349
    %367 = vmatprep.subr.bf16.mxu0 0
    %368 = vmatpush1.bf16.msra.mxu0 %v304
    %369 = vmatprep.subr.bf16.mxu0 0
    %370 = vmatpush1.bf16.msra.mxu0 %v305
    %371 = vmatprep.subr.bf16.mxu0 0
    %372 = vmatpush1.bf16.msra.mxu0 %v306
    %373 = vmatprep.subr.bf16.mxu0 0
    %374 = vmatpush1.bf16.msra.mxu0 %v307
    %375 = vmatprep.subr.bf16.mxu0 0
    %376 = vmatpush1.bf16.msra.mxu0 %v308
    %377 = vmatprep.subr.bf16.mxu0 0
    %378 = vmatpush1.bf16.msra.mxu0 %v309
    %379 = vmatprep.subr.bf16.mxu0 0
    %380 = vmatpush1.bf16.msra.mxu0 %v310
    %381 = vmatprep.subr.bf16.mxu0 0
    %382 = vmatpush1.bf16.msra.mxu0 %v311
    %383 = vmatprep.subr.bf16.mxu0 0
    %384 = vmatpush1.bf16.msra.mxu0 0
    %385 = vmatprep.subr.bf16.mxu0 0
    %386 = vmatpush1.bf16.msra.mxu0 0
    %387 = vmatprep.subr.bf16.mxu0 0
    %388 = vmatpush1.bf16.msra.mxu0 0
    %389 = vmatprep.subr.bf16.mxu0 0
    %390 = vmatpush1.bf16.msra.mxu0 0
    %391 = vmatprep.subr.bf16.mxu0 0
    %392 = vmatpush1.bf16.msra.mxu0 0
    %393 = vmatprep.subr.bf16.mxu0 0
    %394 = vmatpush1.bf16.msra.mxu0 0
    %395 = vmatprep.subr.bf16.mxu0 0
    %396 = vmatpush1.bf16.msra.mxu0 0
    %397 = vmatprep.subr.bf16.mxu0 0
    %398 = vmatpush1.bf16.msra.mxu0 0
    %399 = vmatprep.mubr.bf16.mxu0 0
    %400 = vmatmul.mubr.bf16.gmra.mrb[0].mxu0 %v351
    %v401 = vpop.f32.mrb[0].mxu0
    %v402 = vadd.f32 %v317, %v401
    %v403 = vpop.f32.mrb[0].mxu0
    %v404 = vpop.f32.mrb[0].mxu0
    %v405 = vadd.f32 %v317, %v404
    %v406 = vpop.f32.mrb[0].mxu0
    %407 = vmatprep.mubr.bf16.mxu0 0
    %408 = vmatmul.mubr.bf16.gmra.mrb[0].mxu0 %v352
    %v409 = vpop.f32.mrb[0].mxu0
    %v410 = vadd.f32 %v317, %v409
    %v411 = vpop.f32.mrb[0].mxu0
    %v412 = vpop.f32.mrb[0].mxu0
    %v413 = vadd.f32 %v317, %v412
    %v414 = vpop.f32.mrb[0].mxu0
    %415 = vmatprep.mubr.bf16.mxu0 0
    %416 = vmatmul.mubr.bf16.gmra.mrb[0].mxu0 %v353
    %v417 = vpop.f32.mrb[0].mxu0
    %v418 = vadd.f32 %v317, %v417
    %v419 = vpop.f32.mrb[0].mxu0
    %v420 = vpop.f32.mrb[0].mxu0
    %v421 = vadd.f32 %v317, %v420
    %v422 = vpop.f32.mrb[0].mxu0
    %423 = vmatprep.mubr.bf16.mxu0 0
    %424 = vmatmul.mubr.bf16.gmra.mrb[0].mxu0 %v354
    %v425 = vpop.f32.mrb[0].mxu0
    %v426 = vadd.f32 %v317, %v425
    %v427 = vpop.f32.mrb[0].mxu0
    %v428 = vpop.f32.mrb[0].mxu0
    %v429 = vadd.f32 %v317, %v428
    %v430 = vpop.f32.mrb[0].mxu0
    %431 = vmatprep.mubr.bf16.mxu0 0
    %432 = vmatmul.mubr.bf16.gmra.mrb[0].mxu0 %v355
    %v433 = vpop.f32.mrb[0].mxu0
    %v434 = vadd.f32 %v317, %v433
    %v435 = vpop.f32.mrb[0].mxu0
    %v436 = vpop.f32.mrb[0].mxu0
    %v437 = vadd.f32 %v317, %v436
    %v438 = vpop.f32.mrb[0].mxu0
    %439 = vmatprep.mubr.bf16.mxu0 0
    %440 = vmatmul.mubr.bf16.gmra.mrb[0].mxu0 %v356
    %v441 = vpop.f32.mrb[0].mxu0
    %v442 = vadd.f32 %v317, %v441
    %v443 = vpop.f32.mrb[0].mxu0
    %v444 = vpop.f32.mrb[0].mxu0
    %v445 = vadd.f32 %v317, %v444
    %v446 = vpop.f32.mrb[0].mxu0
    %447 = vmatprep.mubr.bf16.mxu0 0
    %448 = vmatmul.mubr.bf16.gmra.mrb[0].mxu0 %v357
    %v449 = vpop.f32.mrb[0].mxu0
    %v450 = vadd.f32 %v317, %v449
    %v451 = vpop.f32.mrb[0].mxu0
    %v452 = vpop.f32.mrb[0].mxu0
    %v453 = vadd.f32 %v317, %v452
    %v454 = vpop.f32.mrb[0].mxu0
    %455 = vmatprep.mubr.bf16.mxu0 0
    %456 = vmatmul.mubr.bf16.gmra.mrb[0].mxu0 %v358
    %v457 = vpop.f32.mrb[0].mxu0
    %v458 = vadd.f32 %v317, %v457
    %v459 = vpop.f32.mrb[0].mxu0
    %v460 = vpop.f32.mrb[0].mxu0
    %v461 = vadd.f32 %v317, %v460
    %v462 = vpop.f32.mrb[0].mxu0
    %463 = vdwg.mxu0
    %v464 = vmax.f32 %v402, 0.0
    %v465 = vmax.f32 %v405, 0.0
    %v466 = vmax.f32 %v410, 0.0
    %v467 = vmax.f32 %v413, 0.0
    %v468 = vmax.f32 %v418, 0.0
    %v469 = vmax.f32 %v421, 0.0
    %v470 = vmax.f32 %v426, 0.0
    %v471 = vmax.f32 %v429, 0.0
    %v472 = vmax.f32 %v434, 0.0
    %v473 = vmax.f32 %v437, 0.0
    %v474 = vmax.f32 %v442, 0.0
    %v475 = vmax.f32 %v445, 0.0
    %v476 = vmax.f32 %v450, 0.0
    %v477 = vmax.f32 %v453, 0.0
    %v478 = vmax.f32 %v458, 0.0
    %v479 = vmax.f32 %v461, 0.0
    %v480 = vpack.c.bf16 %v465, %v464
    %v481 = vpack.c.bf16 %v467, %v466
    %v482 = vpack.c.bf16 %v469, %v468
    %v483 = vpack.c.bf16 %v471, %v470
    %v484 = vpack.c.bf16 %v473, %v472
    %v485 = vpack.c.bf16 %v475, %v474
    %v486 = vpack.c.bf16 %v477, %v476
    %v487 = vpack.c.bf16 %v479, %v478
    %s488 = scalar_lea.vmem [#allocation7], 64
    %v489 = vld [vmem:[%s488] sm:$0xf]
    %v490 = vld [vmem:[%s488 + $0x4] sm:$0xf]
    %v491 = vld [vmem:[%s488 + $0x8] sm:$0xf]
    %v492 = vld [vmem:[%s488 + $0xc] sm:$0xf]
    %v493 = vld [vmem:[%s488 + $0x10] sm:$0xf]
    %v494 = vld [vmem:[%s488 + $0x14] sm:$0xf]
    %v495 = vld [vmem:[%s488 + $0x18] sm:$0xf]
    %v496 = vld [vmem:[%s488 + $0x1c] sm:$0xf]
    %v497 = vld [vmem:[%s488 + $0x20] sm:$0xf]
    %v498 = vld [vmem:[%s488 + $0x24] sm:$0xf]
    %v499 = vld [vmem:[%s488 + $0x28] sm:$0xf]
    %v500 = vld [vmem:[%s488 + $0x2c] sm:$0xf]
    %v501 = vld [vmem:[%s488 + $0x30] sm:$0xf]
    %v502 = vld [vmem:[%s488 + $0x34] sm:$0xf]
    %v503 = vld [vmem:[%s488 + $0x38] sm:$0xf]
    %v504 = vld [vmem:[%s488 + $0x3c] sm:$0xf]
    %v521 = vunpack.c.l.b16 %v489
    %v522 = vunpack.c.l.b16 %v490
    %v523 = vunpack.c.l.b16 %v491
    %v524 = vunpack.c.l.b16 %v492
    %v525 = vunpack.c.l.b16 %v493
    %v526 = vunpack.c.l.b16 %v494
    %v527 = vunpack.c.l.b16 %v495
    %v528 = vunpack.c.l.b16 %v496
    %v529 = vunpack.c.l.b16 %v497
    %v530 = vunpack.c.l.b16 %v498
    %v531 = vunpack.c.l.b16 %v499
    %v532 = vunpack.c.l.b16 %v500
    %v533 = vunpack.c.l.b16 %v501
    %v534 = vunpack.c.l.b16 %v502
    %v535 = vunpack.c.l.b16 %v503
    %v536 = vunpack.c.l.b16 %v504
    %v537 = vpack.c.b16 %v522, %v521
    %v538 = vpack.c.b16 %v524, %v523
    %v539 = vpack.c.b16 %v526, %v525
    %v540 = vpack.c.b16 %v528, %v527
    %v541 = vpack.c.b16 %v530, %v529
    %v542 = vpack.c.b16 %v532, %v531
    %v543 = vpack.c.b16 %v534, %v533
    %v544 = vpack.c.b16 %v536, %v535
    %553 = vmatprep.subr.bf16.mxu0 0
    %554 = vmatpush1.bf16.msra.mxu0 %v537
    %555 = vmatprep.subr.bf16.mxu0 0
    %556 = vmatpush1.bf16.msra.mxu0 %v538
    %557 = vmatprep.subr.bf16.mxu0 0
    %558 = vmatpush1.bf16.msra.mxu0 %v539
    %559 = vmatprep.subr.bf16.mxu0 0
    %560 = vmatpush1.bf16.msra.mxu0 %v540
    %561 = vmatprep.subr.bf16.mxu0 0
    %562 = vmatpush1.bf16.msra.mxu0 %v541
    %563 = vmatprep.subr.bf16.mxu0 0
    %564 = vmatpush1.bf16.msra.mxu0 %v542
    %565 = vmatprep.subr.bf16.mxu0 0
    %566 = vmatpush1.bf16.msra.mxu0 %v543
    %567 = vmatprep.subr.bf16.mxu0 0
    %568 = vmatpush1.bf16.msra.mxu0 %v544
    %569 = vmatprep.subr.bf16.mxu0 0
    %570 = vmatpush1.bf16.msra.mxu0 0
    %571 = vmatprep.subr.bf16.mxu0 0
    %572 = vmatpush1.bf16.msra.mxu0 0
    %573 = vmatprep.subr.bf16.mxu0 0
    %574 = vmatpush1.bf16.msra.mxu0 0
    %575 = vmatprep.subr.bf16.mxu0 0
    %576 = vmatpush1.bf16.msra.mxu0 0
    %577 = vmatprep.subr.bf16.mxu0 0
    %578 = vmatpush1.bf16.msra.mxu0 0
    %579 = vmatprep.subr.bf16.mxu0 0
    %580 = vmatpush1.bf16.msra.mxu0 0
    %581 = vmatprep.subr.bf16.mxu0 0
    %582 = vmatpush1.bf16.msra.mxu0 0
    %583 = vmatprep.subr.bf16.mxu0 0
    %584 = vmatpush1.bf16.msra.mxu0 0
    %585 = vmatprep.mubr.bf16.mxu0 0
    %586 = vmatmul.mubr.bf16.gmra.mrb[0].mxu0 %v480
    %v587 = vpop.f32.mrb[0].mxu0
    %v588 = vadd.f32 0.0, %v587
    %v589 = vpop.f32.mrb[0].mxu0
    %v590 = vpop.f32.mrb[0].mxu0
    %v591 = vadd.f32 0.0, %v590
    %v592 = vpop.f32.mrb[0].mxu0
    %593 = vmatprep.mubr.bf16.mxu0 0
    %594 = vmatmul.mubr.bf16.gmra.mrb[0].mxu0 %v481
    %v595 = vpop.f32.mrb[0].mxu0
    %v596 = vadd.f32 0.0, %v595
    %v597 = vpop.f32.mrb[0].mxu0
    %v598 = vpop.f32.mrb[0].mxu0
    %v599 = vadd.f32 0.0, %v598
    %v600 = vpop.f32.mrb[0].mxu0
    %601 = vmatprep.mubr.bf16.mxu0 0
    %602 = vmatmul.mubr.bf16.gmra.mrb[0].mxu0 %v482
    %v603 = vpop.f32.mrb[0].mxu0
    %v604 = vadd.f32 0.0, %v603
    %v605 = vpop.f32.mrb[0].mxu0
    %v606 = vpop.f32.mrb[0].mxu0
    %v607 = vadd.f32 0.0, %v606
    %v608 = vpop.f32.mrb[0].mxu0
    %609 = vmatprep.mubr.bf16.mxu0 0
    %610 = vmatmul.mubr.bf16.gmra.mrb[0].mxu0 %v483
    %v611 = vpop.f32.mrb[0].mxu0
    %v612 = vadd.f32 0.0, %v611
    %v613 = vpop.f32.mrb[0].mxu0
    %v614 = vpop.f32.mrb[0].mxu0
    %v615 = vadd.f32 0.0, %v614
    %v616 = vpop.f32.mrb[0].mxu0
    %617 = vmatprep.mubr.bf16.mxu0 0
    %618 = vmatmul.mubr.bf16.gmra.mrb[0].mxu0 %v484
    %v619 = vpop.f32.mrb[0].mxu0
    %v620 = vadd.f32 0.0, %v619
    %v621 = vpop.f32.mrb[0].mxu0
    %v622 = vpop.f32.mrb[0].mxu0
    %v623 = vadd.f32 0.0, %v622
    %v624 = vpop.f32.mrb[0].mxu0
    %625 = vmatprep.mubr.bf16.mxu0 0
    %626 = vmatmul.mubr.bf16.gmra.mrb[0].mxu0 %v485
    %v627 = vpop.f32.mrb[0].mxu0
    %v628 = vadd.f32 0.0, %v627
    %v629 = vpop.f32.mrb[0].mxu0
    %v630 = vpop.f32.mrb[0].mxu0
    %v631 = vadd.f32 0.0, %v630
    %v632 = vpop.f32.mrb[0].mxu0
    %633 = vmatprep.mubr.bf16.mxu0 0
    %634 = vmatmul.mubr.bf16.gmra.mrb[0].mxu0 %v486
    %v635 = vpop.f32.mrb[0].mxu0
    %v636 = vadd.f32 0.0, %v635
    %v637 = vpop.f32.mrb[0].mxu0
    %v638 = vpop.f32.mrb[0].mxu0
    %v639 = vadd.f32 0.0, %v638
    %v640 = vpop.f32.mrb[0].mxu0
    %641 = vmatprep.mubr.bf16.mxu0 0
    %642 = vmatmul.mubr.bf16.gmra.mrb[0].mxu0 %v487
    %v643 = vpop.f32.mrb[0].mxu0
    %v644 = vadd.f32 0.0, %v643
    %v645 = vpop.f32.mrb[0].mxu0
    %v646 = vpop.f32.mrb[0].mxu0
    %v647 = vadd.f32 0.0, %v646
    %v648 = vpop.f32.mrb[0].mxu0
    %649 = vdwg.mxu0
    %v650 = vpack.c.bf16 %v591, %v588
    %v651 = vpack.c.bf16 %v599, %v596
    %v652 = vpack.c.bf16 %v607, %v604
    %v653 = vpack.c.bf16 %v615, %v612
    %v654 = vpack.c.bf16 %v623, %v620
    %v655 = vpack.c.bf16 %v631, %v628
    %v656 = vpack.c.bf16 %v639, %v636
    %v657 = vpack.c.bf16 %v647, %v644
    %s658 = scalar_lea.vmem %s4, 1
    %v659 = vld [vmem:[%s658] sm:$0x1]
    %v661 = vlaneseq
    %v662 = vshrl.u32 %v661, 7
    %v663 = vsub.s32 0, %v662
    %v664 = vrot.slane %v659, %v663
    %666 = vmatprep.subr.bf16.mxu0 0
    %667 = vmatpush1.bf16.msra.mxu0 %v650
    %668 = vmatprep.subr.bf16.mxu0 0
    %669 = vmatpush1.bf16.msra.mxu0 %v651
    %670 = vmatprep.subr.bf16.mxu0 0
    %671 = vmatpush1.bf16.msra.mxu0 %v652
    %672 = vmatprep.subr.bf16.mxu0 0
    %673 = vmatpush1.bf16.msra.mxu0 %v653
    %674 = vmatprep.subr.bf16.mxu0 0
    %675 = vmatpush1.bf16.msra.mxu0 %v654
    %676 = vmatprep.subr.bf16.mxu0 0
    %677 = vmatpush1.bf16.msra.mxu0 %v655
    %678 = vmatprep.subr.bf16.mxu0 0
    %679 = vmatpush1.bf16.msra.mxu0 %v656
    %680 = vmatprep.subr.bf16.mxu0 0
    %681 = vmatpush1.bf16.msra.mxu0 %v657
    %682 = vmatprep.subr.bf16.mxu0 0
    %683 = vmatpush1.bf16.msra.mxu0 0
    %684 = vmatprep.subr.bf16.mxu0 0
    %685 = vmatpush1.bf16.msra.mxu0 0
    %686 = vmatprep.subr.bf16.mxu0 0
    %687 = vmatpush1.bf16.msra.mxu0 0
    %688 = vmatprep.subr.bf16.mxu0 0
    %689 = vmatpush1.bf16.msra.mxu0 0
    %690 = vmatprep.subr.bf16.mxu0 0
    %691 = vmatpush1.bf16.msra.mxu0 0
    %692 = vmatprep.subr.bf16.mxu0 0
    %693 = vmatpush1.bf16.msra.mxu0 0
    %694 = vmatprep.subr.bf16.mxu0 0
    %695 = vmatpush1.bf16.msra.mxu0 0
    %696 = vmatprep.subr.bf16.mxu0 0
    %697 = vmatpush1.bf16.msra.mxu0 0
    %698 = vmatprep.mubr.bf16.mxu0 0
    %699 = vmatmul.mubr.bf16.gmra.mrb[0].mxu0 %v351
    %v700 = vpop.f32.mrb[0].mxu0
    %v701 = vadd.f32 %v664, %v700
    %v702 = vpop.f32.mrb[0].mxu0
    %v703 = vpop.f32.mrb[0].mxu0
    %v704 = vadd.f32 %v664, %v703
    %v705 = vpop.f32.mrb[0].mxu0
    %706 = vmatprep.mubr.bf16.mxu0 0
    %707 = vmatmul.mubr.bf16.gmra.mrb[0].mxu0 %v352
    %v708 = vpop.f32.mrb[0].mxu0
    %v709 = vadd.f32 %v664, %v708
    %v710 = vpop.f32.mrb[0].mxu0
    %v711 = vpop.f32.mrb[0].mxu0
    %v712 = vadd.f32 %v664, %v711
    %v713 = vpop.f32.mrb[0].mxu0
    %714 = vmatprep.mubr.bf16.mxu0 0
    %715 = vmatmul.mubr.bf16.gmra.mrb[0].mxu0 %v353
    %v716 = vpop.f32.mrb[0].mxu0
    %v717 = vadd.f32 %v664, %v716
    %v718 = vpop.f32.mrb[0].mxu0
    %v719 = vpop.f32.mrb[0].mxu0
    %v720 = vadd.f32 %v664, %v719
    %v721 = vpop.f32.mrb[0].mxu0
    %722 = vmatprep.mubr.bf16.mxu0 0
    %723 = vmatmul.mubr.bf16.gmra.mrb[0].mxu0 %v354
    %v724 = vpop.f32.mrb[0].mxu0
    %v725 = vadd.f32 %v664, %v724
    %v726 = vpop.f32.mrb[0].mxu0
    %v727 = vpop.f32.mrb[0].mxu0
    %v728 = vadd.f32 %v664, %v727
    %v729 = vpop.f32.mrb[0].mxu0
    %730 = vmatprep.mubr.bf16.mxu0 0
    %731 = vmatmul.mubr.bf16.gmra.mrb[0].mxu0 %v355
    %v732 = vpop.f32.mrb[0].mxu0
    %v733 = vadd.f32 %v664, %v732
    %v734 = vpop.f32.mrb[0].mxu0
    %v735 = vpop.f32.mrb[0].mxu0
    %v736 = vadd.f32 %v664, %v735
    %v737 = vpop.f32.mrb[0].mxu0
    %738 = vmatprep.mubr.bf16.mxu0 0
    %739 = vmatmul.mubr.bf16.gmra.mrb[0].mxu0 %v356
    %v740 = vpop.f32.mrb[0].mxu0
    %v741 = vadd.f32 %v664, %v740
    %v742 = vpop.f32.mrb[0].mxu0
    %v743 = vpop.f32.mrb[0].mxu0
    %v744 = vadd.f32 %v664, %v743
    %v745 = vpop.f32.mrb[0].mxu0
    %746 = vmatprep.mubr.bf16.mxu0 0
    %747 = vmatmul.mubr.bf16.gmra.mrb[0].mxu0 %v357
    %v748 = vpop.f32.mrb[0].mxu0
    %v749 = vadd.f32 %v664, %v748
    %v750 = vpop.f32.mrb[0].mxu0
    %v751 = vpop.f32.mrb[0].mxu0
    %v752 = vadd.f32 %v664, %v751
    %v753 = vpop.f32.mrb[0].mxu0
    %754 = vmatprep.mubr.bf16.mxu0 0
    %755 = vmatmul.mubr.bf16.gmra.mrb[0].mxu0 %v358
    %v756 = vpop.f32.mrb[0].mxu0
    %v757 = vadd.f32 %v664, %v756
    %v758 = vpop.f32.mrb[0].mxu0
    %v759 = vpop.f32.mrb[0].mxu0
    %v760 = vadd.f32 %v664, %v759
    %v761 = vpop.f32.mrb[0].mxu0
    %762 = vdwg.mxu0
    %v763 = vmax.f32 %v701, 0.0
    %v764 = vmax.f32 %v704, 0.0
    %v765 = vmax.f32 %v709, 0.0
    %v766 = vmax.f32 %v712, 0.0
    %v767 = vmax.f32 %v717, 0.0
    %v768 = vmax.f32 %v720, 0.0
    %v769 = vmax.f32 %v725, 0.0
    %v770 = vmax.f32 %v728, 0.0
    %v771 = vmax.f32 %v733, 0.0
    %v772 = vmax.f32 %v736, 0.0
    %v773 = vmax.f32 %v741, 0.0
    %v774 = vmax.f32 %v744, 0.0
    %v775 = vmax.f32 %v749, 0.0
    %v776 = vmax.f32 %v752, 0.0
    %v777 = vmax.f32 %v757, 0.0
    %v778 = vmax.f32 %v760, 0.0
    %v779 = vpack.c.bf16 %v764, %v763
    %v780 = vpack.c.bf16 %v766, %v765
    %v781 = vpack.c.bf16 %v768, %v767
    %v782 = vpack.c.bf16 %v770, %v769
    %v783 = vpack.c.bf16 %v772, %v771
    %v784 = vpack.c.bf16 %v774, %v773
    %v785 = vpack.c.bf16 %v776, %v775
    %v786 = vpack.c.bf16 %v778, %v777
    %s787 = scalar_lea.vmem [#allocation7], 128
    %v788 = vld [vmem:[%s787] sm:$0xf]
    %v789 = vld [vmem:[%s787 + $0x4] sm:$0xf]
    %v790 = vld [vmem:[%s787 + $0x8] sm:$0xf]
    %v791 = vld [vmem:[%s787 + $0xc] sm:$0xf]
    %v792 = vld [vmem:[%s787 + $0x10] sm:$0xf]
    %v793 = vld [vmem:[%s787 + $0x14] sm:$0xf]
    %v794 = vld [vmem:[%s787 + $0x18] sm:$0xf]
    %v795 = vld [vmem:[%s787 + $0x1c] sm:$0xf]
    %v796 = vld [vmem:[%s787 + $0x20] sm:$0xf]
    %v797 = vld [vmem:[%s787 + $0x24] sm:$0xf]
    %v798 = vld [vmem:[%s787 + $0x28] sm:$0xf]
    %v799 = vld [vmem:[%s787 + $0x2c] sm:$0xf]
    %v800 = vld [vmem:[%s787 + $0x30] sm:$0xf]
    %v801 = vld [vmem:[%s787 + $0x34] sm:$0xf]
    %v802 = vld [vmem:[%s787 + $0x38] sm:$0xf]
    %v803 = vld [vmem:[%s787 + $0x3c] sm:$0xf]
    %v820 = vunpack.c.l.b16 %v788
    %v821 = vunpack.c.l.b16 %v789
    %v822 = vunpack.c.l.b16 %v790
    %v823 = vunpack.c.l.b16 %v791
    %v824 = vunpack.c.l.b16 %v792
    %v825 = vunpack.c.l.b16 %v793
    %v826 = vunpack.c.l.b16 %v794
    %v827 = vunpack.c.l.b16 %v795
    %v828 = vunpack.c.l.b16 %v796
    %v829 = vunpack.c.l.b16 %v797
    %v830 = vunpack.c.l.b16 %v798
    %v831 = vunpack.c.l.b16 %v799
    %v832 = vunpack.c.l.b16 %v800
    %v833 = vunpack.c.l.b16 %v801
    %v834 = vunpack.c.l.b16 %v802
    %v835 = vunpack.c.l.b16 %v803
    %v836 = vpack.c.b16 %v821, %v820
    %v837 = vpack.c.b16 %v823, %v822
    %v838 = vpack.c.b16 %v825, %v824
    %v839 = vpack.c.b16 %v827, %v826
    %v840 = vpack.c.b16 %v829, %v828
    %v841 = vpack.c.b16 %v831, %v830
    %v842 = vpack.c.b16 %v833, %v832
    %v843 = vpack.c.b16 %v835, %v834
    %852 = vmatprep.subr.bf16.mxu0 0
    %853 = vmatpush1.bf16.msra.mxu0 %v836
    %854 = vmatprep.subr.bf16.mxu0 0
    %855 = vmatpush1.bf16.msra.mxu0 %v837
    %856 = vmatprep.subr.bf16.mxu0 0
    %857 = vmatpush1.bf16.msra.mxu0 %v838
    %858 = vmatprep.subr.bf16.mxu0 0
    %859 = vmatpush1.bf16.msra.mxu0 %v839
    %860 = vmatprep.subr.bf16.mxu0 0
    %861 = vmatpush1.bf16.msra.mxu0 %v840
    %862 = vmatprep.subr.bf16.mxu0 0
    %863 = vmatpush1.bf16.msra.mxu0 %v841
    %864 = vmatprep.subr.bf16.mxu0 0
    %865 = vmatpush1.bf16.msra.mxu0 %v842
    %866 = vmatprep.subr.bf16.mxu0 0
    %867 = vmatpush1.bf16.msra.mxu0 %v843
    %868 = vmatprep.subr.bf16.mxu0 0
    %869 = vmatpush1.bf16.msra.mxu0 0
    %870 = vmatprep.subr.bf16.mxu0 0
    %871 = vmatpush1.bf16.msra.mxu0 0
    %872 = vmatprep.subr.bf16.mxu0 0
    %873 = vmatpush1.bf16.msra.mxu0 0
    %874 = vmatprep.subr.bf16.mxu0 0
    %875 = vmatpush1.bf16.msra.mxu0 0
    %876 = vmatprep.subr.bf16.mxu0 0
    %877 = vmatpush1.bf16.msra.mxu0 0
    %878 = vmatprep.subr.bf16.mxu0 0
    %879 = vmatpush1.bf16.msra.mxu0 0
    %880 = vmatprep.subr.bf16.mxu0 0
    %881 = vmatpush1.bf16.msra.mxu0 0
    %882 = vmatprep.subr.bf16.mxu0 0
    %883 = vmatpush1.bf16.msra.mxu0 0
    %884 = vmatprep.mubr.bf16.mxu0 0
    %885 = vmatmul.mubr.bf16.gmra.mrb[0].mxu0 %v779
    %v886 = vpop.f32.mrb[0].mxu0
    %v887 = vadd.f32 0.0, %v886
    %v888 = vpop.f32.mrb[0].mxu0
    %v889 = vpop.f32.mrb[0].mxu0
    %v890 = vadd.f32 0.0, %v889
    %v891 = vpop.f32.mrb[0].mxu0
    %892 = vmatprep.mubr.bf16.mxu0 0
    %893 = vmatmul.mubr.bf16.gmra.mrb[0].mxu0 %v780
    %v894 = vpop.f32.mrb[0].mxu0
    %v895 = vadd.f32 0.0, %v894
    %v896 = vpop.f32.mrb[0].mxu0
    %v897 = vpop.f32.mrb[0].mxu0
    %v898 = vadd.f32 0.0, %v897
    %v899 = vpop.f32.mrb[0].mxu0
    %900 = vmatprep.mubr.bf16.mxu0 0
    %901 = vmatmul.mubr.bf16.gmra.mrb[0].mxu0 %v781
    %v902 = vpop.f32.mrb[0].mxu0
    %v903 = vadd.f32 0.0, %v902
    %v904 = vpop.f32.mrb[0].mxu0
    %v905 = vpop.f32.mrb[0].mxu0
    %v906 = vadd.f32 0.0, %v905
    %v907 = vpop.f32.mrb[0].mxu0
    %908 = vmatprep.mubr.bf16.mxu0 0
    %909 = vmatmul.mubr.bf16.gmra.mrb[0].mxu0 %v782
    %v910 = vpop.f32.mrb[0].mxu0
    %v911 = vadd.f32 0.0, %v910
    %v912 = vpop.f32.mrb[0].mxu0
    %v913 = vpop.f32.mrb[0].mxu0
    %v914 = vadd.f32 0.0, %v913
    %v915 = vpop.f32.mrb[0].mxu0
    %916 = vmatprep.mubr.bf16.mxu0 0
    %917 = vmatmul.mubr.bf16.gmra.mrb[0].mxu0 %v783
    %v918 = vpop.f32.mrb[0].mxu0
    %v919 = vadd.f32 0.0, %v918
    %v920 = vpop.f32.mrb[0].mxu0
    %v921 = vpop.f32.mrb[0].mxu0
    %v922 = vadd.f32 0.0, %v921
    %v923 = vpop.f32.mrb[0].mxu0
    %924 = vmatprep.mubr.bf16.mxu0 0
    %925 = vmatmul.mubr.bf16.gmra.mrb[0].mxu0 %v784
    %v926 = vpop.f32.mrb[0].mxu0
    %v927 = vadd.f32 0.0, %v926
    %v928 = vpop.f32.mrb[0].mxu0
    %v929 = vpop.f32.mrb[0].mxu0
    %v930 = vadd.f32 0.0, %v929
    %v931 = vpop.f32.mrb[0].mxu0
    %932 = vmatprep.mubr.bf16.mxu0 0
    %933 = vmatmul.mubr.bf16.gmra.mrb[0].mxu0 %v785
    %v934 = vpop.f32.mrb[0].mxu0
    %v935 = vadd.f32 0.0, %v934
    %v936 = vpop.f32.mrb[0].mxu0
    %v937 = vpop.f32.mrb[0].mxu0
    %v938 = vadd.f32 0.0, %v937
    %v939 = vpop.f32.mrb[0].mxu0
    %940 = vmatprep.mubr.bf16.mxu0 0
    %941 = vmatmul.mubr.bf16.gmra.mrb[0].mxu0 %v786
    %v942 = vpop.f32.mrb[0].mxu0
    %v943 = vadd.f32 0.0, %v942
    %v944 = vpop.f32.mrb[0].mxu0
    %v945 = vpop.f32.mrb[0].mxu0
    %v946 = vadd.f32 0.0, %v945
    %v947 = vpop.f32.mrb[0].mxu0
    %948 = vdwg.mxu0
    %v949 = vld [vmem:[%s2] sm:$0x1]
    %v950 = vpack.c.bf16 %v890, %v887
    %v951 = vpack.c.bf16 %v898, %v895
    %v952 = vpack.c.bf16 %v906, %v903
    %v953 = vpack.c.bf16 %v914, %v911
    %v954 = vpack.c.bf16 %v922, %v919
    %v955 = vpack.c.bf16 %v930, %v927
    %v956 = vpack.c.bf16 %v938, %v935
    %v957 = vpack.c.bf16 %v946, %v943
    %s958 = scalar_lea.vmem %s4, 2
    %v959 = vld [vmem:[%s958] sm:$0x1]
    %960 = vmatprep.subr.bf16.mxu0 0
    %961 = vmatpush1.bf16.msra.mxu0 %v950
    %962 = vmatprep.subr.bf16.mxu0 0
    %963 = vmatpush1.bf16.msra.mxu0 %v951
    %964 = vmatprep.subr.bf16.mxu0 0
    %965 = vmatpush1.bf16.msra.mxu0 %v952
    %966 = vmatprep.subr.bf16.mxu0 0
    %967 = vmatpush1.bf16.msra.mxu0 %v953
    %968 = vmatprep.subr.bf16.mxu0 0
    %969 = vmatpush1.bf16.msra.mxu0 %v954
    %970 = vmatprep.subr.bf16.mxu0 0
    %971 = vmatpush1.bf16.msra.mxu0 %v955
    %972 = vmatprep.subr.bf16.mxu0 0
    %973 = vmatpush1.bf16.msra.mxu0 %v956
    %974 = vmatprep.subr.bf16.mxu0 0
    %975 = vmatpush1.bf16.msra.mxu0 %v957
    %976 = vmatprep.subr.bf16.mxu0 0
    %977 = vmatpush1.bf16.msra.mxu0 0
    %978 = vmatprep.subr.bf16.mxu0 0
    %979 = vmatpush1.bf16.msra.mxu0 0
    %980 = vmatprep.subr.bf16.mxu0 0
    %981 = vmatpush1.bf16.msra.mxu0 0
    %982 = vmatprep.subr.bf16.mxu0 0
    %983 = vmatpush1.bf16.msra.mxu0 0
    %984 = vmatprep.subr.bf16.mxu0 0
    %985 = vmatpush1.bf16.msra.mxu0 0
    %986 = vmatprep.subr.bf16.mxu0 0
    %987 = vmatpush1.bf16.msra.mxu0 0
    %988 = vmatprep.subr.bf16.mxu0 0
    %989 = vmatpush1.bf16.msra.mxu0 0
    %990 = vmatprep.subr.bf16.mxu0 0
    %991 = vmatpush1.bf16.msra.mxu0 0
    %992 = vmatprep.mubr.bf16.mxu0 0
    %993 = vmatmul.mubr.bf16.gmra.mrb[0].mxu0 %v949
    %v994 = vpop.f32.mrb[0].mxu0
    %v995 = vadd.f32 %v959, %v994
    %v996 = vpop.f32.mrb[0].mxu0
    %v997 = vpop.f32.mrb[0].mxu0
    %v998 = vpop.f32.mrb[0].mxu0
    %999 = vdwg.mxu0
    %1000 = vst [vmem:[#allocation8] sm:$0x1] %v995
    %s1001 = scalar_lea.vmem [#allocation2], 64
    %v1002 = vld [vmem:[%s1001] sm:$0xf]
    %v1003 = vld [vmem:[%s1001 + $0x4] sm:$0xf]
    %v1004 = vld [vmem:[%s1001 + $0x8] sm:$0xf]
    %v1005 = vld [vmem:[%s1001 + $0xc] sm:$0xf]
    %v1006 = vld [vmem:[%s1001 + $0x10] sm:$0xf]
    %v1007 = vld [vmem:[%s1001 + $0x14] sm:$0xf]
    %v1008 = vld [vmem:[%s1001 + $0x18] sm:$0xf]
    %v1009 = vld [vmem:[%s1001 + $0x1c] sm:$0xf]
    %v1010 = vld [vmem:[%s1001 + $0x20] sm:$0xf]
    %v1011 = vld [vmem:[%s1001 + $0x24] sm:$0xf]
    %v1012 = vld [vmem:[%s1001 + $0x28] sm:$0xf]
    %v1013 = vld [vmem:[%s1001 + $0x2c] sm:$0xf]
    %v1014 = vld [vmem:[%s1001 + $0x30] sm:$0xf]
    %v1015 = vld [vmem:[%s1001 + $0x34] sm:$0xf]
    %v1016 = vld [vmem:[%s1001 + $0x38] sm:$0xf]
    %v1017 = vld [vmem:[%s1001 + $0x3c] sm:$0xf]
    %s1018 = scalar_lea.vmem [#allocation5], 64
    %v1019 = vld [vmem:[%s1018] sm:$0xf]
    %v1020 = vld [vmem:[%s1018 + $0x4] sm:$0xf]
    %v1021 = vld [vmem:[%s1018 + $0x8] sm:$0xf]
    %v1022 = vld [vmem:[%s1018 + $0xc] sm:$0xf]
    %v1023 = vld [vmem:[%s1018 + $0x10] sm:$0xf]
    %v1024 = vld [vmem:[%s1018 + $0x14] sm:$0xf]
    %v1025 = vld [vmem:[%s1018 + $0x18] sm:$0xf]
    %v1026 = vld [vmem:[%s1018 + $0x1c] sm:$0xf]
    %v1027 = vld [vmem:[%s1018 + $0x20] sm:$0xf]
    %v1028 = vld [vmem:[%s1018 + $0x24] sm:$0xf]
    %v1029 = vld [vmem:[%s1018 + $0x28] sm:$0xf]
    %v1030 = vld [vmem:[%s1018 + $0x2c] sm:$0xf]
    %v1031 = vld [vmem:[%s1018 + $0x30] sm:$0xf]
    %v1032 = vld [vmem:[%s1018 + $0x34] sm:$0xf]
    %v1033 = vld [vmem:[%s1018 + $0x38] sm:$0xf]
    %v1034 = vld [vmem:[%s1018 + $0x3c] sm:$0xf]
    %v1035 = vld [vmem:[#allocation7] sm:$0xf]
    %v1036 = vld [vmem:[#allocation7 + $0x4] sm:$0xf]
    %v1037 = vld [vmem:[#allocation7 + $0x8] sm:$0xf]
    %v1038 = vld [vmem:[#allocation7 + $0xc] sm:$0xf]
    %v1039 = vld [vmem:[#allocation7 + $0x10] sm:$0xf]
    %v1040 = vld [vmem:[#allocation7 + $0x14] sm:$0xf]
    %v1041 = vld [vmem:[#allocation7 + $0x18] sm:$0xf]
    %v1042 = vld [vmem:[#allocation7 + $0x1c] sm:$0xf]
    %v1043 = vld [vmem:[#allocation7 + $0x20] sm:$0xf]
    %v1044 = vld [vmem:[#allocation7 + $0x24] sm:$0xf]
    %v1045 = vld [vmem:[#allocation7 + $0x28] sm:$0xf]
    %v1046 = vld [vmem:[#allocation7 + $0x2c] sm:$0xf]
    %v1047 = vld [vmem:[#allocation7 + $0x30] sm:$0xf]
    %v1048 = vld [vmem:[#allocation7 + $0x34] sm:$0xf]
    %v1049 = vld [vmem:[#allocation7 + $0x38] sm:$0xf]
    %v1050 = vld [vmem:[#allocation7 + $0x3c] sm:$0xf]
    %v1067 = vunpack.c.l.b16 %v1019
    %v1068 = vunpack.c.l.b16 %v1020
    %v1069 = vunpack.c.l.b16 %v1021
    %v1070 = vunpack.c.l.b16 %v1022
    %v1071 = vunpack.c.l.b16 %v1023
    %v1072 = vunpack.c.l.b16 %v1024
    %v1073 = vunpack.c.l.b16 %v1025
    %v1074 = vunpack.c.l.b16 %v1026
    %v1075 = vunpack.c.l.b16 %v1027
    %v1076 = vunpack.c.l.b16 %v1028
    %v1077 = vunpack.c.l.b16 %v1029
    %v1078 = vunpack.c.l.b16 %v1030
    %v1079 = vunpack.c.l.b16 %v1031
    %v1080 = vunpack.c.l.b16 %v1032
    %v1081 = vunpack.c.l.b16 %v1033
    %v1082 = vunpack.c.l.b16 %v1034
    %v1083 = vpack.c.b16 %v1068, %v1067
    %v1084 = vpack.c.b16 %v1070, %v1069
    %v1085 = vpack.c.b16 %v1072, %v1071
    %v1086 = vpack.c.b16 %v1074, %v1073
    %v1087 = vpack.c.b16 %v1076, %v1075
    %v1088 = vpack.c.b16 %v1078, %v1077
    %v1089 = vpack.c.b16 %v1080, %v1079
    %v1090 = vpack.c.b16 %v1082, %v1081
    %v1115 = vunpack.c.l.b16 %v1035
    %v1116 = vunpack.c.l.b16 %v1036
    %v1117 = vunpack.c.l.b16 %v1037
    %v1118 = vunpack.c.l.b16 %v1038
    %v1119 = vunpack.c.l.b16 %v1039
    %v1120 = vunpack.c.l.b16 %v1040
    %v1121 = vunpack.c.l.b16 %v1041
    %v1122 = vunpack.c.l.b16 %v1042
    %v1123 = vunpack.c.l.b16 %v1043
    %v1124 = vunpack.c.l.b16 %v1044
    %v1125 = vunpack.c.l.b16 %v1045
    %v1126 = vunpack.c.l.b16 %v1046
    %v1127 = vunpack.c.l.b16 %v1047
    %v1128 = vunpack.c.l.b16 %v1048
    %v1129 = vunpack.c.l.b16 %v1049
    %v1130 = vunpack.c.l.b16 %v1050
    %v1131 = vpack.c.b16 %v1116, %v1115
    %v1132 = vpack.c.b16 %v1118, %v1117
    %v1133 = vpack.c.b16 %v1120, %v1119
    %v1134 = vpack.c.b16 %v1122, %v1121
    %v1135 = vpack.c.b16 %v1124, %v1123
    %v1136 = vpack.c.b16 %v1126, %v1125
    %v1137 = vpack.c.b16 %v1128, %v1127
    %v1138 = vpack.c.b16 %v1130, %v1129
    %1147 = vmatprep.subr.bf16.mxu0 0
    %1148 = vmatpush1.bf16.msra.mxu0 %v1131
    %1149 = vmatprep.subr.bf16.mxu0 0
    %1150 = vmatpush1.bf16.msra.mxu0 %v1132
    %1151 = vmatprep.subr.bf16.mxu0 0
    %1152 = vmatpush1.bf16.msra.mxu0 %v1133
    %1153 = vmatprep.subr.bf16.mxu0 0
    %1154 = vmatpush1.bf16.msra.mxu0 %v1134
    %1155 = vmatprep.subr.bf16.mxu0 0
    %1156 = vmatpush1.bf16.msra.mxu0 %v1135
    %1157 = vmatprep.subr.bf16.mxu0 0
    %1158 = vmatpush1.bf16.msra.mxu0 %v1136
    %1159 = vmatprep.subr.bf16.mxu0 0
    %1160 = vmatpush1.bf16.msra.mxu0 %v1137
    %1161 = vmatprep.subr.bf16.mxu0 0
    %1162 = vmatpush1.bf16.msra.mxu0 %v1138
    %1163 = vmatprep.subr.bf16.mxu0 0
    %1164 = vmatpush1.bf16.msra.mxu0 0
    %1165 = vmatprep.subr.bf16.mxu0 0
    %1166 = vmatpush1.bf16.msra.mxu0 0
    %1167 = vmatprep.subr.bf16.mxu0 0
    %1168 = vmatpush1.bf16.msra.mxu0 0
    %1169 = vmatprep.subr.bf16.mxu0 0
    %1170 = vmatpush1.bf16.msra.mxu0 0
    %1171 = vmatprep.subr.bf16.mxu0 0
    %1172 = vmatpush1.bf16.msra.mxu0 0
    %1173 = vmatprep.subr.bf16.mxu0 0
    %1174 = vmatpush1.bf16.msra.mxu0 0
    %1175 = vmatprep.subr.bf16.mxu0 0
    %1176 = vmatpush1.bf16.msra.mxu0 0
    %1177 = vmatprep.subr.bf16.mxu0 0
    %1178 = vmatpush1.bf16.msra.mxu0 0
    %1179 = vmatprep.mubr.bf16.mxu0 0
    %1180 = vmatmul.mubr.bf16.gmra.mrb[0].mxu0 %v1083
    %v1181 = vpop.f32.mrb[0].mxu0
    %v1182 = vadd.f32 0.0, %v1181
    %v1183 = vpop.f32.mrb[0].mxu0
    %v1184 = vpop.f32.mrb[0].mxu0
    %v1185 = vadd.f32 0.0, %v1184
    %v1186 = vpop.f32.mrb[0].mxu0
    %1187 = vmatprep.mubr.bf16.mxu0 0
    %1188 = vmatmul.mubr.bf16.gmra.mrb[0].mxu0 %v1084
    %v1189 = vpop.f32.mrb[0].mxu0
    %v1190 = vadd.f32 0.0, %v1189
    %v1191 = vpop.f32.mrb[0].mxu0
    %v1192 = vpop.f32.mrb[0].mxu0
    %v1193 = vadd.f32 0.0, %v1192
    %v1194 = vpop.f32.mrb[0].mxu0
    %1195 = vmatprep.mubr.bf16.mxu0 0
    %1196 = vmatmul.mubr.bf16.gmra.mrb[0].mxu0 %v1085
    %v1197 = vpop.f32.mrb[0].mxu0
    %v1198 = vadd.f32 0.0, %v1197
    %v1199 = vpop.f32.mrb[0].mxu0
    %v1200 = vpop.f32.mrb[0].mxu0
    %v1201 = vadd.f32 0.0, %v1200
    %v1202 = vpop.f32.mrb[0].mxu0
    %1203 = vmatprep.mubr.bf16.mxu0 0
    %1204 = vmatmul.mubr.bf16.gmra.mrb[0].mxu0 %v1086
    %v1205 = vpop.f32.mrb[0].mxu0
    %v1206 = vadd.f32 0.0, %v1205
    %v1207 = vpop.f32.mrb[0].mxu0
    %v1208 = vpop.f32.mrb[0].mxu0
    %v1209 = vadd.f32 0.0, %v1208
    %v1210 = vpop.f32.mrb[0].mxu0
    %1211 = vmatprep.mubr.bf16.mxu0 0
    %1212 = vmatmul.mubr.bf16.gmra.mrb[0].mxu0 %v1087
    %v1213 = vpop.f32.mrb[0].mxu0
    %v1214 = vadd.f32 0.0, %v1213
    %v1215 = vpop.f32.mrb[0].mxu0
    %v1216 = vpop.f32.mrb[0].mxu0
    %v1217 = vadd.f32 0.0, %v1216
    %v1218 = vpop.f32.mrb[0].mxu0
    %1219 = vmatprep.mubr.bf16.mxu0 0
    %1220 = vmatmul.mubr.bf16.gmra.mrb[0].mxu0 %v1088
    %v1221 = vpop.f32.mrb[0].mxu0
    %v1222 = vadd.f32 0.0, %v1221
    %v1223 = vpop.f32.mrb[0].mxu0
    %v1224 = vpop.f32.mrb[0].mxu0
    %v1225 = vadd.f32 0.0, %v1224
    %v1226 = vpop.f32.mrb[0].mxu0
    %1227 = vmatprep.mubr.bf16.mxu0 0
    %1228 = vmatmul.mubr.bf16.gmra.mrb[0].mxu0 %v1089
    %v1229 = vpop.f32.mrb[0].mxu0
    %v1230 = vadd.f32 0.0, %v1229
    %v1231 = vpop.f32.mrb[0].mxu0
    %v1232 = vpop.f32.mrb[0].mxu0
    %v1233 = vadd.f32 0.0, %v1232
    %v1234 = vpop.f32.mrb[0].mxu0
    %1235 = vmatprep.mubr.bf16.mxu0 0
    %1236 = vmatmul.mubr.bf16.gmra.mrb[0].mxu0 %v1090
    %v1237 = vpop.f32.mrb[0].mxu0
    %v1238 = vadd.f32 0.0, %v1237
    %v1239 = vpop.f32.mrb[0].mxu0
    %v1240 = vpop.f32.mrb[0].mxu0
    %v1241 = vadd.f32 0.0, %v1240
    %v1242 = vpop.f32.mrb[0].mxu0
    %1243 = vdwg.mxu0
    %v1244 = vpack.c.bf16 %v1185, %v1182
    %v1245 = vpack.c.bf16 %v1193, %v1190
    %v1246 = vpack.c.bf16 %v1201, %v1198
    %v1247 = vpack.c.bf16 %v1209, %v1206
    %v1248 = vpack.c.bf16 %v1217, %v1214
    %v1249 = vpack.c.bf16 %v1225, %v1222
    %v1250 = vpack.c.bf16 %v1233, %v1230
    %v1251 = vpack.c.bf16 %v1241, %v1238
    %v1252 = vld [vmem:[%s4] sm:$0x1]
    %v1254 = vlaneseq
    %v1255 = vshrl.u32 %v1254, 7
    %v1256 = vsub.s32 0, %v1255
    %v1257 = vrot.slane %v1252, %v1256
    %v1275 = vunpack.c.l.b16 %v1002
    %v1276 = vunpack.c.l.b16 %v1003
    %v1277 = vunpack.c.l.b16 %v1004
    %v1278 = vunpack.c.l.b16 %v1005
    %v1279 = vunpack.c.l.b16 %v1006
    %v1280 = vunpack.c.l.b16 %v1007
    %v1281 = vunpack.c.l.b16 %v1008
    %v1282 = vunpack.c.l.b16 %v1009
    %v1283 = vunpack.c.l.b16 %v1010
    %v1284 = vunpack.c.l.b16 %v1011
    %v1285 = vunpack.c.l.b16 %v1012
    %v1286 = vunpack.c.l.b16 %v1013
    %v1287 = vunpack.c.l.b16 %v1014
    %v1288 = vunpack.c.l.b16 %v1015
    %v1289 = vunpack.c.l.b16 %v1016
    %v1290 = vunpack.c.l.b16 %v1017
    %v1291 = vpack.c.b16 %v1276, %v1275
    %v1292 = vpack.c.b16 %v1278, %v1277
    %v1293 = vpack.c.b16 %v1280, %v1279
    %v1294 = vpack.c.b16 %v1282, %v1281
    %v1295 = vpack.c.b16 %v1284, %v1283
    %v1296 = vpack.c.b16 %v1286, %v1285
    %v1297 = vpack.c.b16 %v1288, %v1287
    %v1298 = vpack.c.b16 %v1290, %v1289
    %1307 = vmatprep.subr.bf16.mxu0 0
    %1308 = vmatpush1.bf16.msra.mxu0 %v1244
    %1309 = vmatprep.subr.bf16.mxu0 0
    %1310 = vmatpush1.bf16.msra.mxu0 %v1245
    %1311 = vmatprep.subr.bf16.mxu0 0
    %1312 = vmatpush1.bf16.msra.mxu0 %v1246
    %1313 = vmatprep.subr.bf16.mxu0 0
    %1314 = vmatpush1.bf16.msra.mxu0 %v1247
    %1315 = vmatprep.subr.bf16.mxu0 0
    %1316 = vmatpush1.bf16.msra.mxu0 %v1248
    %1317 = vmatprep.subr.bf16.mxu0 0
    %1318 = vmatpush1.bf16.msra.mxu0 %v1249
    %1319 = vmatprep.subr.bf16.mxu0 0
    %1320 = vmatpush1.bf16.msra.mxu0 %v1250
    %1321 = vmatprep.subr.bf16.mxu0 0
    %1322 = vmatpush1.bf16.msra.mxu0 %v1251
    %1323 = vmatprep.subr.bf16.mxu0 0
    %1324 = vmatpush1.bf16.msra.mxu0 0
    %1325 = vmatprep.subr.bf16.mxu0 0
    %1326 = vmatpush1.bf16.msra.mxu0 0
    %1327 = vmatprep.subr.bf16.mxu0 0
    %1328 = vmatpush1.bf16.msra.mxu0 0
    %1329 = vmatprep.subr.bf16.mxu0 0
    %1330 = vmatpush1.bf16.msra.mxu0 0
    %1331 = vmatprep.subr.bf16.mxu0 0
    %1332 = vmatpush1.bf16.msra.mxu0 0
    %1333 = vmatprep.subr.bf16.mxu0 0
    %1334 = vmatpush1.bf16.msra.mxu0 0
    %1335 = vmatprep.subr.bf16.mxu0 0
    %1336 = vmatpush1.bf16.msra.mxu0 0
    %1337 = vmatprep.subr.bf16.mxu0 0
    %1338 = vmatpush1.bf16.msra.mxu0 0
    %1339 = vmatprep.mubr.bf16.mxu0 0
    %1340 = vmatmul.mubr.bf16.gmra.mrb[0].mxu0 %v1291
    %v1341 = vpop.f32.mrb[0].mxu0
    %v1342 = vadd.f32 %v1257, %v1341
    %v1343 = vpop.f32.mrb[0].mxu0
    %v1344 = vpop.f32.mrb[0].mxu0
    %v1345 = vadd.f32 %v1257, %v1344
    %v1346 = vpop.f32.mrb[0].mxu0
    %1347 = vmatprep.mubr.bf16.mxu0 0
    %1348 = vmatmul.mubr.bf16.gmra.mrb[0].mxu0 %v1292
    %v1349 = vpop.f32.mrb[0].mxu0
    %v1350 = vadd.f32 %v1257, %v1349
    %v1351 = vpop.f32.mrb[0].mxu0
    %v1352 = vpop.f32.mrb[0].mxu0
    %v1353 = vadd.f32 %v1257, %v1352
    %v1354 = vpop.f32.mrb[0].mxu0
    %1355 = vmatprep.mubr.bf16.mxu0 0
    %1356 = vmatmul.mubr.bf16.gmra.mrb[0].mxu0 %v1293
    %v1357 = vpop.f32.mrb[0].mxu0
    %v1358 = vadd.f32 %v1257, %v1357
    %v1359 = vpop.f32.mrb[0].mxu0
    %v1360 = vpop.f32.mrb[0].mxu0
    %v1361 = vadd.f32 %v1257, %v1360
    %v1362 = vpop.f32.mrb[0].mxu0
    %1363 = vmatprep.mubr.bf16.mxu0 0
    %1364 = vmatmul.mubr.bf16.gmra.mrb[0].mxu0 %v1294
    %v1365 = vpop.f32.mrb[0].mxu0
    %v1366 = vadd.f32 %v1257, %v1365
    %v1367 = vpop.f32.mrb[0].mxu0
    %v1368 = vpop.f32.mrb[0].mxu0
    %v1369 = vadd.f32 %v1257, %v1368
    %v1370 = vpop.f32.mrb[0].mxu0
    %1371 = vmatprep.mubr.bf16.mxu0 0
    %1372 = vmatmul.mubr.bf16.gmra.mrb[0].mxu0 %v1295
    %v1373 = vpop.f32.mrb[0].mxu0
    %v1374 = vadd.f32 %v1257, %v1373
    %v1375 = vpop.f32.mrb[0].mxu0
    %v1376 = vpop.f32.mrb[0].mxu0
    %v1377 = vadd.f32 %v1257, %v1376
    %v1378 = vpop.f32.mrb[0].mxu0
    %1379 = vmatprep.mubr.bf16.mxu0 0
    %1380 = vmatmul.mubr.bf16.gmra.mrb[0].mxu0 %v1296
    %v1381 = vpop.f32.mrb[0].mxu0
    %v1382 = vadd.f32 %v1257, %v1381
    %v1383 = vpop.f32.mrb[0].mxu0
    %v1384 = vpop.f32.mrb[0].mxu0
    %v1385 = vadd.f32 %v1257, %v1384
    %v1386 = vpop.f32.mrb[0].mxu0
    %1387 = vmatprep.mubr.bf16.mxu0 0
    %1388 = vmatmul.mubr.bf16.gmra.mrb[0].mxu0 %v1297
    %v1389 = vpop.f32.mrb[0].mxu0
    %v1390 = vadd.f32 %v1257, %v1389
    %v1391 = vpop.f32.mrb[0].mxu0
    %v1392 = vpop.f32.mrb[0].mxu0
    %v1393 = vadd.f32 %v1257, %v1392
    %v1394 = vpop.f32.mrb[0].mxu0
    %1395 = vmatprep.mubr.bf16.mxu0 0
    %1396 = vmatmul.mubr.bf16.gmra.mrb[0].mxu0 %v1298
    %v1397 = vpop.f32.mrb[0].mxu0
    %v1398 = vadd.f32 %v1257, %v1397
    %v1399 = vpop.f32.mrb[0].mxu0
    %v1400 = vpop.f32.mrb[0].mxu0
    %v1401 = vadd.f32 %v1257, %v1400
    %v1402 = vpop.f32.mrb[0].mxu0
    %1403 = vdwg.mxu0
    %v1404 = vmax.f32 %v1342, 0.0
    %v1405 = vmax.f32 %v1345, 0.0
    %v1406 = vmax.f32 %v1350, 0.0
    %v1407 = vmax.f32 %v1353, 0.0
    %v1408 = vmax.f32 %v1358, 0.0
    %v1409 = vmax.f32 %v1361, 0.0
    %v1410 = vmax.f32 %v1366, 0.0
    %v1411 = vmax.f32 %v1369, 0.0
    %v1412 = vmax.f32 %v1374, 0.0
    %v1413 = vmax.f32 %v1377, 0.0
    %v1414 = vmax.f32 %v1382, 0.0
    %v1415 = vmax.f32 %v1385, 0.0
    %v1416 = vmax.f32 %v1390, 0.0
    %v1417 = vmax.f32 %v1393, 0.0
    %v1418 = vmax.f32 %v1398, 0.0
    %v1419 = vmax.f32 %v1401, 0.0
    %v1420 = vpack.c.bf16 %v1405, %v1404
    %v1421 = vpack.c.bf16 %v1407, %v1406
    %v1422 = vpack.c.bf16 %v1409, %v1408
    %v1423 = vpack.c.bf16 %v1411, %v1410
    %v1424 = vpack.c.bf16 %v1413, %v1412
    %v1425 = vpack.c.bf16 %v1415, %v1414
    %v1426 = vpack.c.bf16 %v1417, %v1416
    %v1427 = vpack.c.bf16 %v1419, %v1418
    %v1428 = vld [vmem:[%s488] sm:$0xf]
    %v1429 = vld [vmem:[%s488 + $0x4] sm:$0xf]
    %v1430 = vld [vmem:[%s488 + $0x8] sm:$0xf]
    %v1431 = vld [vmem:[%s488 + $0xc] sm:$0xf]
    %v1432 = vld [vmem:[%s488 + $0x10] sm:$0xf]
    %v1433 = vld [vmem:[%s488 + $0x14] sm:$0xf]
    %v1434 = vld [vmem:[%s488 + $0x18] sm:$0xf]
    %v1435 = vld [vmem:[%s488 + $0x1c] sm:$0xf]
    %v1436 = vld [vmem:[%s488 + $0x20] sm:$0xf]
    %v1437 = vld [vmem:[%s488 + $0x24] sm:$0xf]
    %v1438 = vld [vmem:[%s488 + $0x28] sm:$0xf]
    %v1439 = vld [vmem:[%s488 + $0x2c] sm:$0xf]
    %v1440 = vld [vmem:[%s488 + $0x30] sm:$0xf]
    %v1441 = vld [vmem:[%s488 + $0x34] sm:$0xf]
    %v1442 = vld [vmem:[%s488 + $0x38] sm:$0xf]
    %v1443 = vld [vmem:[%s488 + $0x3c] sm:$0xf]
    %v1460 = vunpack.c.l.b16 %v1428
    %v1461 = vunpack.c.l.b16 %v1429
    %v1462 = vunpack.c.l.b16 %v1430
    %v1463 = vunpack.c.l.b16 %v1431
    %v1464 = vunpack.c.l.b16 %v1432
    %v1465 = vunpack.c.l.b16 %v1433
    %v1466 = vunpack.c.l.b16 %v1434
    %v1467 = vunpack.c.l.b16 %v1435
    %v1468 = vunpack.c.l.b16 %v1436
    %v1469 = vunpack.c.l.b16 %v1437
    %v1470 = vunpack.c.l.b16 %v1438
    %v1471 = vunpack.c.l.b16 %v1439
    %v1472 = vunpack.c.l.b16 %v1440
    %v1473 = vunpack.c.l.b16 %v1441
    %v1474 = vunpack.c.l.b16 %v1442
    %v1475 = vunpack.c.l.b16 %v1443
    %v1476 = vpack.c.b16 %v1461, %v1460
    %v1477 = vpack.c.b16 %v1463, %v1462
    %v1478 = vpack.c.b16 %v1465, %v1464
    %v1479 = vpack.c.b16 %v1467, %v1466
    %v1480 = vpack.c.b16 %v1469, %v1468
    %v1481 = vpack.c.b16 %v1471, %v1470
    %v1482 = vpack.c.b16 %v1473, %v1472
    %v1483 = vpack.c.b16 %v1475, %v1474
    %1492 = vmatprep.subr.bf16.mxu0 0
    %1493 = vmatpush1.bf16.msra.mxu0 %v1476
    %1494 = vmatprep.subr.bf16.mxu0 0
    %1495 = vmatpush1.bf16.msra.mxu0 %v1477
    %1496 = vmatprep.subr.bf16.mxu0 0
    %1497 = vmatpush1.bf16.msra.mxu0 %v1478
    %1498 = vmatprep.subr.bf16.mxu0 0
    %1499 = vmatpush1.bf16.msra.mxu0 %v1479
    %1500 = vmatprep.subr.bf16.mxu0 0
    %1501 = vmatpush1.bf16.msra.mxu0 %v1480
    %1502 = vmatprep.subr.bf16.mxu0 0
    %1503 = vmatpush1.bf16.msra.mxu0 %v1481
    %1504 = vmatprep.subr.bf16.mxu0 0
    %1505 = vmatpush1.bf16.msra.mxu0 %v1482
    %1506 = vmatprep.subr.bf16.mxu0 0
    %1507 = vmatpush1.bf16.msra.mxu0 %v1483
    %1508 = vmatprep.subr.bf16.mxu0 0
    %1509 = vmatpush1.bf16.msra.mxu0 0
    %1510 = vmatprep.subr.bf16.mxu0 0
    %1511 = vmatpush1.bf16.msra.mxu0 0
    %1512 = vmatprep.subr.bf16.mxu0 0
    %1513 = vmatpush1.bf16.msra.mxu0 0
    %1514 = vmatprep.subr.bf16.mxu0 0
    %1515 = vmatpush1.bf16.msra.mxu0 0
    %1516 = vmatprep.subr.bf16.mxu0 0
    %1517 = vmatpush1.bf16.msra.mxu0 0
    %1518 = vmatprep.subr.bf16.mxu0 0
    %1519 = vmatpush1.bf16.msra.mxu0 0
    %1520 = vmatprep.subr.bf16.mxu0 0
    %1521 = vmatpush1.bf16.msra.mxu0 0
    %1522 = vmatprep.subr.bf16.mxu0 0
    %1523 = vmatpush1.bf16.msra.mxu0 0
    %1524 = vmatprep.mubr.bf16.mxu0 0
    %1525 = vmatmul.mubr.bf16.gmra.mrb[0].mxu0 %v1420
    %v1526 = vpop.f32.mrb[0].mxu0
    %v1527 = vadd.f32 0.0, %v1526
    %v1528 = vpop.f32.mrb[0].mxu0
    %v1529 = vpop.f32.mrb[0].mxu0
    %v1530 = vadd.f32 0.0, %v1529
    %v1531 = vpop.f32.mrb[0].mxu0
    %1532 = vmatprep.mubr.bf16.mxu0 0
    %1533 = vmatmul.mubr.bf16.gmra.mrb[0].mxu0 %v1421
    %v1534 = vpop.f32.mrb[0].mxu0
    %v1535 = vadd.f32 0.0, %v1534
    %v1536 = vpop.f32.mrb[0].mxu0
    %v1537 = vpop.f32.mrb[0].mxu0
    %v1538 = vadd.f32 0.0, %v1537
    %v1539 = vpop.f32.mrb[0].mxu0
    %1540 = vmatprep.mubr.bf16.mxu0 0
    %1541 = vmatmul.mubr.bf16.gmra.mrb[0].mxu0 %v1422
    %v1542 = vpop.f32.mrb[0].mxu0
    %v1543 = vadd.f32 0.0, %v1542
    %v1544 = vpop.f32.mrb[0].mxu0
    %v1545 = vpop.f32.mrb[0].mxu0
    %v1546 = vadd.f32 0.0, %v1545
    %v1547 = vpop.f32.mrb[0].mxu0
    %1548 = vmatprep.mubr.bf16.mxu0 0
    %1549 = vmatmul.mubr.bf16.gmra.mrb[0].mxu0 %v1423
    %v1550 = vpop.f32.mrb[0].mxu0
    %v1551 = vadd.f32 0.0, %v1550
    %v1552 = vpop.f32.mrb[0].mxu0
    %v1553 = vpop.f32.mrb[0].mxu0
    %v1554 = vadd.f32 0.0, %v1553
    %v1555 = vpop.f32.mrb[0].mxu0
    %1556 = vmatprep.mubr.bf16.mxu0 0
    %1557 = vmatmul.mubr.bf16.gmra.mrb[0].mxu0 %v1424
    %v1558 = vpop.f32.mrb[0].mxu0
    %v1559 = vadd.f32 0.0, %v1558
    %v1560 = vpop.f32.mrb[0].mxu0
    %v1561 = vpop.f32.mrb[0].mxu0
    %v1562 = vadd.f32 0.0, %v1561
    %v1563 = vpop.f32.mrb[0].mxu0
    %1564 = vmatprep.mubr.bf16.mxu0 0
    %1565 = vmatmul.mubr.bf16.gmra.mrb[0].mxu0 %v1425
    %v1566 = vpop.f32.mrb[0].mxu0
    %v1567 = vadd.f32 0.0, %v1566
    %v1568 = vpop.f32.mrb[0].mxu0
    %v1569 = vpop.f32.mrb[0].mxu0
    %v1570 = vadd.f32 0.0, %v1569
    %v1571 = vpop.f32.mrb[0].mxu0
    %1572 = vmatprep.mubr.bf16.mxu0 0
    %1573 = vmatmul.mubr.bf16.gmra.mrb[0].mxu0 %v1426
    %v1574 = vpop.f32.mrb[0].mxu0
    %v1575 = vadd.f32 0.0, %v1574
    %v1576 = vpop.f32.mrb[0].mxu0
    %v1577 = vpop.f32.mrb[0].mxu0
    %v1578 = vadd.f32 0.0, %v1577
    %v1579 = vpop.f32.mrb[0].mxu0
    %1580 = vmatprep.mubr.bf16.mxu0 0
    %1581 = vmatmul.mubr.bf16.gmra.mrb[0].mxu0 %v1427
    %v1582 = vpop.f32.mrb[0].mxu0
    %v1583 = vadd.f32 0.0, %v1582
    %v1584 = vpop.f32.mrb[0].mxu0
    %v1585 = vpop.f32.mrb[0].mxu0
    %v1586 = vadd.f32 0.0, %v1585
    %v1587 = vpop.f32.mrb[0].mxu0
    %1588 = vdwg.mxu0
    %v1589 = vpack.c.bf16 %v1530, %v1527
    %v1590 = vpack.c.bf16 %v1538, %v1535
    %v1591 = vpack.c.bf16 %v1546, %v1543
    %v1592 = vpack.c.bf16 %v1554, %v1551
    %v1593 = vpack.c.bf16 %v1562, %v1559
    %v1594 = vpack.c.bf16 %v1570, %v1567
    %v1595 = vpack.c.bf16 %v1578, %v1575
    %v1596 = vpack.c.bf16 %v1586, %v1583
    %v1597 = vld [vmem:[%s658] sm:$0x1]
    %v1599 = vlaneseq
    %v1600 = vshrl.u32 %v1599, 7
    %v1601 = vsub.s32 0, %v1600
    %v1602 = vrot.slane %v1597, %v1601
    %1604 = vmatprep.subr.bf16.mxu0 0
    %1605 = vmatpush1.bf16.msra.mxu0 %v1589
    %1606 = vmatprep.subr.bf16.mxu0 0
    %1607 = vmatpush1.bf16.msra.mxu0 %v1590
    %1608 = vmatprep.subr.bf16.mxu0 0
    %1609 = vmatpush1.bf16.msra.mxu0 %v1591
    %1610 = vmatprep.subr.bf16.mxu0 0
    %1611 = vmatpush1.bf16.msra.mxu0 %v1592
    %1612 = vmatprep.subr.bf16.mxu0 0
    %1613 = vmatpush1.bf16.msra.mxu0 %v1593
    %1614 = vmatprep.subr.bf16.mxu0 0
    %1615 = vmatpush1.bf16.msra.mxu0 %v1594
    %1616 = vmatprep.subr.bf16.mxu0 0
    %1617 = vmatpush1.bf16.msra.mxu0 %v1595
    %1618 = vmatprep.subr.bf16.mxu0 0
    %1619 = vmatpush1.bf16.msra.mxu0 %v1596
    %1620 = vmatprep.subr.bf16.mxu0 0
    %1621 = vmatpush1.bf16.msra.mxu0 0
    %1622 = vmatprep.subr.bf16.mxu0 0
    %1623 = vmatpush1.bf16.msra.mxu0 0
    %1624 = vmatprep.subr.bf16.mxu0 0
    %1625 = vmatpush1.bf16.msra.mxu0 0
    %1626 = vmatprep.subr.bf16.mxu0 0
    %1627 = vmatpush1.bf16.msra.mxu0 0
    %1628 = vmatprep.subr.bf16.mxu0 0
    %1629 = vmatpush1.bf16.msra.mxu0 0
    %1630 = vmatprep.subr.bf16.mxu0 0
    %1631 = vmatpush1.bf16.msra.mxu0 0
    %1632 = vmatprep.subr.bf16.mxu0 0
    %1633 = vmatpush1.bf16.msra.mxu0 0
    %1634 = vmatprep.subr.bf16.mxu0 0
    %1635 = vmatpush1.bf16.msra.mxu0 0
    %1636 = vmatprep.mubr.bf16.mxu0 0
    %1637 = vmatmul.mubr.bf16.gmra.mrb[0].mxu0 %v1291
    %v1638 = vpop.f32.mrb[0].mxu0
    %v1639 = vadd.f32 %v1602, %v1638
    %v1640 = vpop.f32.mrb[0].mxu0
    %v1641 = vpop.f32.mrb[0].mxu0
    %v1642 = vadd.f32 %v1602, %v1641
    %v1643 = vpop.f32.mrb[0].mxu0
    %1644 = vmatprep.mubr.bf16.mxu0 0
    %1645 = vmatmul.mubr.bf16.gmra.mrb[0].mxu0 %v1292
    %v1646 = vpop.f32.mrb[0].mxu0
    %v1647 = vadd.f32 %v1602, %v1646
    %v1648 = vpop.f32.mrb[0].mxu0
    %v1649 = vpop.f32.mrb[0].mxu0
    %v1650 = vadd.f32 %v1602, %v1649
    %v1651 = vpop.f32.mrb[0].mxu0
    %1652 = vmatprep.mubr.bf16.mxu0 0
    %1653 = vmatmul.mubr.bf16.gmra.mrb[0].mxu0 %v1293
    %v1654 = vpop.f32.mrb[0].mxu0
    %v1655 = vadd.f32 %v1602, %v1654
    %v1656 = vpop.f32.mrb[0].mxu0
    %v1657 = vpop.f32.mrb[0].mxu0
    %v1658 = vadd.f32 %v1602, %v1657
    %v1659 = vpop.f32.mrb[0].mxu0
    %1660 = vmatprep.mubr.bf16.mxu0 0
    %1661 = vmatmul.mubr.bf16.gmra.mrb[0].mxu0 %v1294
    %v1662 = vpop.f32.mrb[0].mxu0
    %v1663 = vadd.f32 %v1602, %v1662
    %v1664 = vpop.f32.mrb[0].mxu0
    %v1665 = vpop.f32.mrb[0].mxu0
    %v1666 = vadd.f32 %v1602, %v1665
    %v1667 = vpop.f32.mrb[0].mxu0
    %1668 = vmatprep.mubr.bf16.mxu0 0
    %1669 = vmatmul.mubr.bf16.gmra.mrb[0].mxu0 %v1295
    %v1670 = vpop.f32.mrb[0].mxu0
    %v1671 = vadd.f32 %v1602, %v1670
    %v1672 = vpop.f32.mrb[0].mxu0
    %v1673 = vpop.f32.mrb[0].mxu0
    %v1674 = vadd.f32 %v1602, %v1673
    %v1675 = vpop.f32.mrb[0].mxu0
    %1676 = vmatprep.mubr.bf16.mxu0 0
    %1677 = vmatmul.mubr.bf16.gmra.mrb[0].mxu0 %v1296
    %v1678 = vpop.f32.mrb[0].mxu0
    %v1679 = vadd.f32 %v1602, %v1678
    %v1680 = vpop.f32.mrb[0].mxu0
    %v1681 = vpop.f32.mrb[0].mxu0
    %v1682 = vadd.f32 %v1602, %v1681
    %v1683 = vpop.f32.mrb[0].mxu0
    %1684 = vmatprep.mubr.bf16.mxu0 0
    %1685 = vmatmul.mubr.bf16.gmra.mrb[0].mxu0 %v1297
    %v1686 = vpop.f32.mrb[0].mxu0
    %v1687 = vadd.f32 %v1602, %v1686
    %v1688 = vpop.f32.mrb[0].mxu0
    %v1689 = vpop.f32.mrb[0].mxu0
    %v1690 = vadd.f32 %v1602, %v1689
    %v1691 = vpop.f32.mrb[0].mxu0
    %1692 = vmatprep.mubr.bf16.mxu0 0
    %1693 = vmatmul.mubr.bf16.gmra.mrb[0].mxu0 %v1298
    %v1694 = vpop.f32.mrb[0].mxu0
    %v1695 = vadd.f32 %v1602, %v1694
    %v1696 = vpop.f32.mrb[0].mxu0
    %v1697 = vpop.f32.mrb[0].mxu0
    %v1698 = vadd.f32 %v1602, %v1697
    %v1699 = vpop.f32.mrb[0].mxu0
    %1700 = vdwg.mxu0
    %v1701 = vmax.f32 %v1639, 0.0
    %v1702 = vmax.f32 %v1642, 0.0
    %v1703 = vmax.f32 %v1647, 0.0
    %v1704 = vmax.f32 %v1650, 0.0
    %v1705 = vmax.f32 %v1655, 0.0
    %v1706 = vmax.f32 %v1658, 0.0
    %v1707 = vmax.f32 %v1663, 0.0
    %v1708 = vmax.f32 %v1666, 0.0
    %v1709 = vmax.f32 %v1671, 0.0
    %v1710 = vmax.f32 %v1674, 0.0
    %v1711 = vmax.f32 %v1679, 0.0
    %v1712 = vmax.f32 %v1682, 0.0
    %v1713 = vmax.f32 %v1687, 0.0
    %v1714 = vmax.f32 %v1690, 0.0
    %v1715 = vmax.f32 %v1695, 0.0
    %v1716 = vmax.f32 %v1698, 0.0
    %v1717 = vpack.c.bf16 %v1702, %v1701
    %v1718 = vpack.c.bf16 %v1704, %v1703
    %v1719 = vpack.c.bf16 %v1706, %v1705
    %v1720 = vpack.c.bf16 %v1708, %v1707
    %v1721 = vpack.c.bf16 %v1710, %v1709
    %v1722 = vpack.c.bf16 %v1712, %v1711
    %v1723 = vpack.c.bf16 %v1714, %v1713
    %v1724 = vpack.c.bf16 %v1716, %v1715
    %v1725 = vld [vmem:[%s787] sm:$0xf]
    %v1726 = vld [vmem:[%s787 + $0x4] sm:$0xf]
    %v1727 = vld [vmem:[%s787 + $0x8] sm:$0xf]
    %v1728 = vld [vmem:[%s787 + $0xc] sm:$0xf]
    %v1729 = vld [vmem:[%s787 + $0x10] sm:$0xf]
    %v1730 = vld [vmem:[%s787 + $0x14] sm:$0xf]
    %v1731 = vld [vmem:[%s787 + $0x18] sm:$0xf]
    %v1732 = vld [vmem:[%s787 + $0x1c] sm:$0xf]
    %v1733 = vld [vmem:[%s787 + $0x20] sm:$0xf]
    %v1734 = vld [vmem:[%s787 + $0x24] sm:$0xf]
    %v1735 = vld [vmem:[%s787 + $0x28] sm:$0xf]
    %v1736 = vld [vmem:[%s787 + $0x2c] sm:$0xf]
    %v1737 = vld [vmem:[%s787 + $0x30] sm:$0xf]
    %v1738 = vld [vmem:[%s787 + $0x34] sm:$0xf]
    %v1739 = vld [vmem:[%s787 + $0x38] sm:$0xf]
    %v1740 = vld [vmem:[%s787 + $0x3c] sm:$0xf]
    %v1757 = vunpack.c.l.b16 %v1725
    %v1758 = vunpack.c.l.b16 %v1726
    %v1759 = vunpack.c.l.b16 %v1727
    %v1760 = vunpack.c.l.b16 %v1728
    %v1761 = vunpack.c.l.b16 %v1729
    %v1762 = vunpack.c.l.b16 %v1730
    %v1763 = vunpack.c.l.b16 %v1731
    %v1764 = vunpack.c.l.b16 %v1732
    %v1765 = vunpack.c.l.b16 %v1733
    %v1766 = vunpack.c.l.b16 %v1734
    %v1767 = vunpack.c.l.b16 %v1735
    %v1768 = vunpack.c.l.b16 %v1736
    %v1769 = vunpack.c.l.b16 %v1737
    %v1770 = vunpack.c.l.b16 %v1738
    %v1771 = vunpack.c.l.b16 %v1739
    %v1772 = vunpack.c.l.b16 %v1740
    %v1773 = vpack.c.b16 %v1758, %v1757
    %v1774 = vpack.c.b16 %v1760, %v1759
    %v1775 = vpack.c.b16 %v1762, %v1761
    %v1776 = vpack.c.b16 %v1764, %v1763
    %v1777 = vpack.c.b16 %v1766, %v1765
    %v1778 = vpack.c.b16 %v1768, %v1767
    %v1779 = vpack.c.b16 %v1770, %v1769
    %v1780 = vpack.c.b16 %v1772, %v1771
    %1789 = vmatprep.subr.bf16.mxu0 0
    %1790 = vmatpush1.bf16.msra.mxu0 %v1773
    %1791 = vmatprep.subr.bf16.mxu0 0
    %1792 = vmatpush1.bf16.msra.mxu0 %v1774
    %1793 = vmatprep.subr.bf16.mxu0 0
    %1794 = vmatpush1.bf16.msra.mxu0 %v1775
    %1795 = vmatprep.subr.bf16.mxu0 0
    %1796 = vmatpush1.bf16.msra.mxu0 %v1776
    %1797 = vmatprep.subr.bf16.mxu0 0
    %1798 = vmatpush1.bf16.msra.mxu0 %v1777
    %1799 = vmatprep.subr.bf16.mxu0 0
    %1800 = vmatpush1.bf16.msra.mxu0 %v1778
    %1801 = vmatprep.subr.bf16.mxu0 0
    %1802 = vmatpush1.bf16.msra.mxu0 %v1779
    %1803 = vmatprep.subr.bf16.mxu0 0
    %1804 = vmatpush1.bf16.msra.mxu0 %v1780
    %1805 = vmatprep.subr.bf16.mxu0 0
    %1806 = vmatpush1.bf16.msra.mxu0 0
    %1807 = vmatprep.subr.bf16.mxu0 0
    %1808 = vmatpush1.bf16.msra.mxu0 0
    %1809 = vmatprep.subr.bf16.mxu0 0
    %1810 = vmatpush1.bf16.msra.mxu0 0
    %1811 = vmatprep.subr.bf16.mxu0 0
    %1812 = vmatpush1.bf16.msra.mxu0 0
    %1813 = vmatprep.subr.bf16.mxu0 0
    %1814 = vmatpush1.bf16.msra.mxu0 0
    %1815 = vmatprep.subr.bf16.mxu0 0
    %1816 = vmatpush1.bf16.msra.mxu0 0
    %1817 = vmatprep.subr.bf16.mxu0 0
    %1818 = vmatpush1.bf16.msra.mxu0 0
    %1819 = vmatprep.subr.bf16.mxu0 0
    %1820 = vmatpush1.bf16.msra.mxu0 0
    %1821 = vmatprep.mubr.bf16.mxu0 0
    %1822 = vmatmul.mubr.bf16.gmra.mrb[0].mxu0 %v1717
    %v1823 = vpop.f32.mrb[0].mxu0
    %v1824 = vadd.f32 0.0, %v1823
    %v1825 = vpop.f32.mrb[0].mxu0
    %v1826 = vpop.f32.mrb[0].mxu0
    %v1827 = vadd.f32 0.0, %v1826
    %v1828 = vpop.f32.mrb[0].mxu0
    %1829 = vmatprep.mubr.bf16.mxu0 0
    %1830 = vmatmul.mubr.bf16.gmra.mrb[0].mxu0 %v1718
    %v1831 = vpop.f32.mrb[0].mxu0
    %v1832 = vadd.f32 0.0, %v1831
    %v1833 = vpop.f32.mrb[0].mxu0
    %v1834 = vpop.f32.mrb[0].mxu0
    %v1835 = vadd.f32 0.0, %v1834
    %v1836 = vpop.f32.mrb[0].mxu0
    %1837 = vmatprep.mubr.bf16.mxu0 0
    %1838 = vmatmul.mubr.bf16.gmra.mrb[0].mxu0 %v1719
    %v1839 = vpop.f32.mrb[0].mxu0
    %v1840 = vadd.f32 0.0, %v1839
    %v1841 = vpop.f32.mrb[0].mxu0
    %v1842 = vpop.f32.mrb[0].mxu0
    %v1843 = vadd.f32 0.0, %v1842
    %v1844 = vpop.f32.mrb[0].mxu0
    %1845 = vmatprep.mubr.bf16.mxu0 0
    %1846 = vmatmul.mubr.bf16.gmra.mrb[0].mxu0 %v1720
    %v1847 = vpop.f32.mrb[0].mxu0
    %v1848 = vadd.f32 0.0, %v1847
    %v1849 = vpop.f32.mrb[0].mxu0
    %v1850 = vpop.f32.mrb[0].mxu0
    %v1851 = vadd.f32 0.0, %v1850
    %v1852 = vpop.f32.mrb[0].mxu0
    %1853 = vmatprep.mubr.bf16.mxu0 0
    %1854 = vmatmul.mubr.bf16.gmra.mrb[0].mxu0 %v1721
    %v1855 = vpop.f32.mrb[0].mxu0
    %v1856 = vadd.f32 0.0, %v1855
    %v1857 = vpop.f32.mrb[0].mxu0
    %v1858 = vpop.f32.mrb[0].mxu0
    %v1859 = vadd.f32 0.0, %v1858
    %v1860 = vpop.f32.mrb[0].mxu0
    %1861 = vmatprep.mubr.bf16.mxu0 0
    %1862 = vmatmul.mubr.bf16.gmra.mrb[0].mxu0 %v1722
    %v1863 = vpop.f32.mrb[0].mxu0
    %v1864 = vadd.f32 0.0, %v1863
    %v1865 = vpop.f32.mrb[0].mxu0
    %v1866 = vpop.f32.mrb[0].mxu0
    %v1867 = vadd.f32 0.0, %v1866
    %v1868 = vpop.f32.mrb[0].mxu0
    %1869 = vmatprep.mubr.bf16.mxu0 0
    %1870 = vmatmul.mubr.bf16.gmra.mrb[0].mxu0 %v1723
    %v1871 = vpop.f32.mrb[0].mxu0
    %v1872 = vadd.f32 0.0, %v1871
    %v1873 = vpop.f32.mrb[0].mxu0
    %v1874 = vpop.f32.mrb[0].mxu0
    %v1875 = vadd.f32 0.0, %v1874
    %v1876 = vpop.f32.mrb[0].mxu0
    %1877 = vmatprep.mubr.bf16.mxu0 0
    %1878 = vmatmul.mubr.bf16.gmra.mrb[0].mxu0 %v1724
    %v1879 = vpop.f32.mrb[0].mxu0
    %v1880 = vadd.f32 0.0, %v1879
    %v1881 = vpop.f32.mrb[0].mxu0
    %v1882 = vpop.f32.mrb[0].mxu0
    %v1883 = vadd.f32 0.0, %v1882
    %v1884 = vpop.f32.mrb[0].mxu0
    %1885 = vdwg.mxu0
    %s1886 = scalar_lea.vmem %s2, 1
    %v1887 = vld [vmem:[%s1886] sm:$0x1]
    %v1888 = vpack.c.bf16 %v1827, %v1824
    %v1889 = vpack.c.bf16 %v1835, %v1832
    %v1890 = vpack.c.bf16 %v1843, %v1840
    %v1891 = vpack.c.bf16 %v1851, %v1848
    %v1892 = vpack.c.bf16 %v1859, %v1856
    %v1893 = vpack.c.bf16 %v1867, %v1864
    %v1894 = vpack.c.bf16 %v1875, %v1872
    %v1895 = vpack.c.bf16 %v1883, %v1880
    %v1896 = vld [vmem:[%s958] sm:$0x1]
    %1897 = vmatprep.subr.bf16.mxu0 0
    %1898 = vmatpush1.bf16.msra.mxu0 %v1888
    %1899 = vmatprep.subr.bf16.mxu0 0
    %1900 = vmatpush1.bf16.msra.mxu0 %v1889
    %1901 = vmatprep.subr.bf16.mxu0 0
    %1902 = vmatpush1.bf16.msra.mxu0 %v1890
    %1903 = vmatprep.subr.bf16.mxu0 0
    %1904 = vmatpush1.bf16.msra.mxu0 %v1891
    %1905 = vmatprep.subr.bf16.mxu0 0
    %1906 = vmatpush1.bf16.msra.mxu0 %v1892
    %1907 = vmatprep.subr.bf16.mxu0 0
    %1908 = vmatpush1.bf16.msra.mxu0 %v1893
    %1909 = vmatprep.subr.bf16.mxu0 0
    %1910 = vmatpush1.bf16.msra.mxu0 %v1894
    %1911 = vmatprep.subr.bf16.mxu0 0
    %1912 = vmatpush1.bf16.msra.mxu0 %v1895
    %1913 = vmatprep.subr.bf16.mxu0 0
    %1914 = vmatpush1.bf16.msra.mxu0 0
    %1915 = vmatprep.subr.bf16.mxu0 0
    %1916 = vmatpush1.bf16.msra.mxu0 0
    %1917 = vmatprep.subr.bf16.mxu0 0
    %1918 = vmatpush1.bf16.msra.mxu0 0
    %1919 = vmatprep.subr.bf16.mxu0 0
    %1920 = vmatpush1.bf16.msra.mxu0 0
    %1921 = vmatprep.subr.bf16.mxu0 0
    %1922 = vmatpush1.bf16.msra.mxu0 0
    %1923 = vmatprep.subr.bf16.mxu0 0
    %1924 = vmatpush1.bf16.msra.mxu0 0
    %1925 = vmatprep.subr.bf16.mxu0 0
    %1926 = vmatpush1.bf16.msra.mxu0 0
    %1927 = vmatprep.subr.bf16.mxu0 0
    %1928 = vmatpush1.bf16.msra.mxu0 0
    %1929 = vmatprep.mubr.bf16.mxu0 0
    %1930 = vmatmul.mubr.bf16.gmra.mrb[0].mxu0 %v1887
    %v1931 = vpop.f32.mrb[0].mxu0
    %v1932 = vadd.f32 %v1896, %v1931
    %v1933 = vpop.f32.mrb[0].mxu0
    %v1934 = vpop.f32.mrb[0].mxu0
    %v1935 = vpop.f32.mrb[0].mxu0
    %1936 = vdwg.mxu0
    %s1937 = scalar_lea.vmem [#allocation8], 1
    %1938 = vst [vmem:[%s1937] sm:$0x1] %v1932
    // Predicated region
    $region34: #{tpu_custom_call.1} parent=1 // pred_check
      _
    $region35: #{tpu_custom_call.1} parent=1 // pred_check_branch
      %1940 = sbr.rel (0) target = $region37
    $region36: #{tpu_custom_call.1} parent=1 // pred_region
      %s1942 = ssub.s32 32, 32
      %1943 = vsyncadd [#allocation4], %s1942
      %s1944 = sshll.u32 [#allocation8], 4
      %s1945 = int_to_ptr.vmem [resolvable:$true] %s1944
      %1950 = dma.vmem_to_hbm [thread:$0]  %s1945, 32, %s5, [#allocation4], 16, 16, 1
    $region37: #{tpu_custom_call.1} parent=1 // pred_fallthru
      _
    // Predicated region
    $region38: #{tpu_custom_call.1} parent=1 // pred_check
      _
    $region39: #{tpu_custom_call.1} parent=1 // pred_check_branch
      %1952 = sbr.rel (0) target = $region41
    $region40: #{tpu_custom_call.1} parent=1 // pred_region
      %1953 = dma.done [#allocation4], 32
    $region41: #{tpu_custom_call.1} parent=1 // pred_fallthru
      _
    %1954 = vsyncpa [#allocation3], 1
    %1955 = vsyncpa [#allocation6], 1
    %1956 = vsyncpa [#allocation4], 1

</llo_original>
